<compile_context>
chip_gen: v7x
topology: tpu7x:2x2x1
jax: 0.10.0
libtpu: 0.0.40
codegen_flags: <defaults>
</compile_context>

<pallas_src>
import functools
import math

import jax
import jax.numpy as jnp
from jax import lax
from jax.experimental import pallas as pl
from jax.experimental.pallas import tpu as pltpu

LN_EPS = 1e-12
INV_SQRT2 = 1.0 / math.sqrt(2.0)


# ----------------------------- small helpers --------------------------------

def _round_up(x, m):
    return (x + m - 1) // m * m


def _divisor_le(n, cap):
    c = max(1, min(n, cap))
    while n % c:
        c -= 1
    return c


def _gelu(x):
    # exact erf-based gelu, matching the PyTorch reference `gelu`
    return x * 0.5 * (1.0 + lax.erf(x * INV_SQRT2))


def _layernorm_padded(x, gamma, beta, n_real, eps=LN_EPS):
    """TF-style LayerNorm over the last dim, where the last dim is zero-padded
    from n_real to x.shape[-1] lanes.  Mean/variance use only the real lanes;
    gamma/beta are zero in the padded lanes so padded outputs stay exactly 0."""
    hp = x.shape[-1]
    inv_n = 1.0 / float(n_real)
    u = jnp.sum(x, axis=-1, keepdims=True) * inv_n      # pad lanes contribute 0
    xc = x - u
    if n_real != hp:
        mask = lax.broadcasted_iota(jnp.int32, (1, hp), 1) < n_real
        xc_m = jnp.where(mask, xc, 0.0)
    else:
        xc_m = xc
    var = jnp.sum(xc_m * xc_m, axis=-1, keepdims=True) * inv_n
    return gamma * (xc * lax.rsqrt(var + eps)) + beta


def _vmem_capacity_bytes():
    try:
        return int(pltpu.get_tpu_info().vmem_capacity_bytes)
    except Exception:                       # pragma: no cover
        return 64 * 1024 * 1024             # conservative (v7x per-core VMEM)


# ------------------------------- the kernel ---------------------------------

def fmlp_encoder_kernel(x_ref, cs_ref, ab_ref, wr_ref, wi_ref,
                        g1_ref, be1_ref, w1_ref, b1_ref, w2_ref, b2_ref,
                        g2_ref, be2_ref, o_ref, act_ref,
                        *, bt, cb, seq, fp, h_real, mm_dtype):
    hp = act_ref.shape[-1]
    f2 = 2 * fp
    l = pl.program_id(1)                     # layer index (innermost grid axis)

    # Layer 0: load the (bt, S, Hp) activation block into the resident f32
    # carry; subsequent layers read/write the carry only (no HBM round trip).
    @pl.when(l == 0)
    def _():
        act_ref[...] = x_ref[...].astype(jnp.float32)

    # per-layer parameters (leading block dim of 1 indexed away)
    cs = cs_ref[...]                         # (2Fp, S)  stacked [Cr; Ci]
    ab = ab_ref[...]                         # (S, 2Fp)  stacked [A | B]
    wr = wr_ref[...]                         # (1, Fp, Hp) filter Re (f32)
    wi = wi_ref[...]                         # (1, Fp, Hp) filter Im (f32)
    g1, be1 = g1_ref[0], be1_ref[0]          # (1, Hp)
    w1, b1 = w1_ref[0], b1_ref[0]            # (Hp, H4p), (1, H4p)
    w2, b2 = w2_ref[0], b2_ref[0]            # (H4p, Hp), (1, Hp)
    g2, be2 = g2_ref[0], be2_ref[0]          # (1, Hp)

    # hoisted broadcasts (not inside the chunk loop: no CSE on broadcast)
    cs_b = jnp.broadcast_to(cs[None], (cb, f2, seq))
    ab_b = jnp.broadcast_to(ab[None], (cb, seq, f2))

    def chunk(c):
        c0 = c * cb
        x3 = act_ref[pl.ds(c0, cb)]                              # (cb,S,Hp) f32

        # ---- FilterLayer: batched stacked rfft / filter / irfft ------------
        xri = jnp.einsum("bfs,bsh->bfh", cs_b, x3.astype(cs.dtype),
                         preferred_element_type=jnp.float32)     # (cb,2Fp,Hp)
        xr = xri[:, :fp, :]                                      # aligned: Fp%8==0
        xi = xri[:, fp:, :]
        yr = xr * wr - xi * wi
        yi = xr * wi + xi * wr
        yri = jnp.concatenate([yr, yi], axis=1).astype(ab.dtype)
        y3 = jnp.einsum("bsf,bfh->bsh", ab_b, yri,
                        preferred_element_type=jnp.float32)      # (cb,S,Hp)

        x2 = x3.reshape(cb * seq, hp)
        y2 = y3.reshape(cb * seq, hp)
        h2 = _layernorm_padded(y2 + x2, g1, be1, h_real)

        # ---- Intermediate: Linear(H->4H) -> gelu -> Linear(4H->H) -> LN ----
        t = jnp.dot(h2.astype(mm_dtype), w1,
                    preferred_element_type=jnp.float32) + b1
        t = _gelu(t)
        t2 = jnp.dot(t.astype(mm_dtype), w2,
                     preferred_element_type=jnp.float32) + b2
        out2 = _layernorm_padded(t2 + h2, g2, be2, h_real)

        out3 = out2.reshape(cb, seq, hp)
        act_ref[pl.ds(c0, cb)] = out3                            # carry (f32)
        o_ref[0, pl.ds(c0, cb)] = out3.astype(o_ref.dtype)       # per-layer out

    n_chunks = bt // cb
    if n_chunks == 1:
        chunk(0)
    else:
        pl.loop(0, n_chunks)(chunk)          # bounds the f32 GELU-slab live range


# --------------------------- parameter preparation --------------------------

def make_dft_matrices(S, Fp, dft_dtype=jnp.float32):
    """Stacked ortho rfft analysis (2Fp, S) and irfft synthesis (S, 2Fp)
    matrices, zero-padded along the frequency axis (a mathematical no-op)."""
    F = S // 2 + 1
    k = jnp.arange(F, dtype=jnp.float32)[:, None]
    s = jnp.arange(S, dtype=jnp.float32)[None, :]
    ang = 2.0 * jnp.pi * k * s / S
    scale = 1.0 / jnp.sqrt(jnp.float32(S))
    Cr = jnp.cos(ang) * scale                 # (F, S)  Re part of rfft
    Ci = -jnp.sin(ang) * scale                # (F, S)  Im part of rfft
    c = jnp.ones((F,), jnp.float32)           # irfft weights: DC/Nyquist 1x, rest 2x
    if S % 2 == 0:
        c = c.at[1:F - 1].set(2.0)
    else:
        c = c.at[1:].set(2.0)
    A = (jnp.cos(ang).T * c[None, :]) * scale     # (S, F) acts on Re
    Bm = (-jnp.sin(ang).T * c[None, :]) * scale   # (S, F) acts on Im
    padf = Fp - F
    Cr = jnp.pad(Cr, ((0, padf), (0, 0)))
    Ci = jnp.pad(Ci, ((0, padf), (0, 0)))
    A = jnp.pad(A, ((0, 0), (0, padf)))
    Bm = jnp.pad(Bm, ((0, 0), (0, padf)))
    CS = jnp.concatenate([Cr, Ci], axis=0).astype(dft_dtype)   # (2Fp, S)
    AB = jnp.concatenate([A, Bm], axis=1).astype(dft_dtype)    # (S, 2Fp)
    return CS, AB


def prepare_layer_params(raw, Fp, Hp, H4p, mm_dtype):
    """Pad / cast one layer's parameters to the kernel layout.
    NOTE: zero padding is load-bearing — padded lanes of gamma/beta, the filter
    weights and the W2 columns must stay 0 so the padded hidden lanes remain
    exactly 0 from layer to layer."""
    def pad2(a, r, c):
        return jnp.pad(a, ((0, r - a.shape[0]), (0, c - a.shape[1])))

    cw = raw["complex_weight"]
    if cw.ndim == 4:                      # PyTorch stores (1, F, H, 2)
        cw = cw[0]
    return dict(
        wr=pad2(cw[..., 0], Fp, Hp),                        # f32 (elementwise)
        wi=pad2(cw[..., 1], Fp, Hp),
        W1=pad2(raw["W1"], Hp, H4p).astype(mm_dtype),
        b1=pad2(raw["b1"].reshape(1, -1), 1, H4p),
        W2=pad2(raw["W2"], H4p, Hp).astype(mm_dtype),
        b2=pad2(raw["b2"].reshape(1, -1), 1, Hp),
        g1=pad2(raw["g1"].reshape(1, -1), 1, Hp),
        be1=pad2(raw["be1"].reshape(1, -1), 1, Hp),
        g2=pad2(raw["g2"].reshape(1, -1), 1, Hp),
        be2=pad2(raw["be2"].reshape(1, -1), 1, Hp),
    )


def prepare_encoder_params(raw_layers, Fp, Hp, H4p, mm_dtype):
    per = [prepare_layer_params(r, Fp, Hp, H4p, mm_dtype) for r in raw_layers]
    return {k: jnp.stack([p[k] for p in per], axis=0) for k in per[0]}


# ------------------------------ tile selection -------------------------------

def _choose_tiles(B, S, Hp, H4p, Fp, act_bytes, mm_bytes, dft_bytes, vmem_cap):
    """Pick (batch_tile, chunk_batch) from a VMEM budget."""
    budget = int(vmem_cap * 0.7)          # leave room for compiler scratch/spills
    # layer-varying weights are double-buffered across the layer grid axis
    fixed = (2 * (2 * Fp * Hp * 4
                  + Hp * H4p * mm_bytes + H4p * Hp * mm_bytes
                  + (6 * Hp + H4p) * 4)
             + 2 * (4 * Fp * S * dft_bytes))            # CS + AB (2 buffers)
    cb_cap = max(1, 512 // max(1, S))      # cap the f32 GELU slab at ~512 rows

    def need(bt, cb):
        io = 4 * bt * S * Hp * act_bytes                 # in + out, double-buffered
        carry = bt * S * Hp * 4                          # resident f32 activation
        chunk = (cb * S * (H4p * (4 + mm_bytes) + 7 * Hp * 4)
                 + 2 * cb * Fp * (2 * Hp * 4 + 2 * S * dft_bytes))
        return fixed + io + carry + (3 * chunk) // 2     # 1.5x slack on temps

    bt_cap = max(1, min(B, 4096 // max(1, S)))           # MXU M ~<= 4K rows
    bt_cap = min(bt_cap, max(1, -(-B // 2)))             # >=2 tiles for v7x 2 TCs
    bt, cb = 1, 1
    for cand in range(bt_cap, 0, -1):
        c = _divisor_le(cand, cb_cap)
        if need(cand, c) <= budget:
            bt, cb = cand, c
            break
    return bt, cb


# ------------------------------- pallas_call ---------------------------------

def _encoder_call(x_pad, CS, AB, P, *, bt, cb, h_real, mm_dtype, vmem_limit):
    Bp, S, Hp = x_pad.shape
    L = P["W1"].shape[0]
    Fp = CS.shape[0] // 2
    H4p = P["W1"].shape[2]

    kernel = functools.partial(fmlp_encoder_kernel, bt=bt, cb=cb, seq=S, fp=Fp,
                               h_real=h_real, mm_dtype=mm_dtype)

    def const_spec(shape):                 # grid-invariant (DFT matrices)
        return pl.BlockSpec(shape, lambda b, l: (0,) * len(shape))

    def layer_spec(shape):                 # per-layer params, leading L axis
        return pl.BlockSpec((1,) + shape, lambda b, l: (l,) + (0,) * len(shape))

    in_specs = [
        pl.BlockSpec((bt, S, Hp), lambda b, l: (b, 0, 0)),   # x (read at l==0)
        const_spec((2 * Fp, S)),                             # stacked rfft matrix
        const_spec((S, 2 * Fp)),                             # stacked irfft matrix
        layer_spec((Fp, Hp)), layer_spec((Fp, Hp)),          # filter Re / Im
        layer_spec((1, Hp)), layer_spec((1, Hp)),            # LN1 gamma / beta
        layer_spec((Hp, H4p)), layer_spec((1, H4p)),         # dense_1 W / b
        layer_spec((H4p, Hp)), layer_spec((1, Hp)),          # dense_2 W / b
        layer_spec((1, Hp)), layer_spec((1, Hp)),            # LN2 gamma / beta
    ]
    return pl.pallas_call(
        kernel,
        out_shape=jax.ShapeDtypeStruct((L, Bp, S, Hp), x_pad.dtype),
        grid=(Bp // bt, L),
        in_specs=in_specs,
        out_specs=pl.BlockSpec((1, bt, S, Hp), lambda b, l: (l, b, 0, 0)),
        scratch_shapes=[pltpu.VMEM((bt, S, Hp), jnp.float32)],   # layer carry
        compiler_params=pltpu.CompilerParams(
            dimension_semantics=("parallel", "arbitrary"),
            vmem_limit_bytes=vmem_limit),
    )(x_pad, CS, AB, P["wr"], P["wi"], P["g1"], P["be1"],
      P["W1"], P["b1"], P["W2"], P["b2"], P["g2"], P["be2"])


def fmlp_encoder_forward(hidden_states, attention_mask, raw_layers, *,
                         output_all_encoded_layers=True,
                         matmul_dtype=jnp.bfloat16, act_dtype=jnp.bfloat16,
                         dft_dtype=jnp.float32,
                         batch_tile=None, chunk_batch=None):
    """FMLPEncoder.forward: one fused pallas_call over (batch tiles, layers)."""
    del attention_mask                     # unused by the PyTorch forward as well
    B, S, H = hidden_states.shape
    L = len(raw_layers)
    H4 = raw_layers[0]["W1"].shape[1]
    F = S // 2 + 1
    Hp = _round_up(H, 128)                 # lane-dense hidden dim
    H4p = _round_up(H4, 128)               # lane-dense intermediate dim
    Fp = _round_up(F, 8)                   # sublane-aligned frequency count

    act_bytes = jnp.dtype(act_dtype).itemsize
    mm_bytes = jnp.dtype(matmul_dtype).itemsize
    dft_bytes = jnp.dtype(dft_dtype).itemsize
    vmem_cap = _vmem_capacity_bytes()
    vmem_limit = int(vmem_cap * 0.85)      # ~54 MiB on v7x, ~108 MiB on v5e/v6e

    if batch_tile is None:
        bt, cb = _choose_tiles(B, S, Hp, H4p, Fp,
                               act_bytes, mm_bytes, dft_bytes, vmem_cap)
    else:
        bt = int(batch_tile)
        cb = int(chunk_batch) if chunk_batch is not None else \
            _divisor_le(bt, max(1, 512 // max(1, S)))
        assert bt % cb == 0, "chunk_batch must divide batch_tile"

    Bp = -(-B // bt) * bt                  # pad batch to a multiple of bt
    x = jnp.pad(hidden_states,
                ((0, Bp - B), (0, 0), (0, Hp - H))).astype(act_dtype)

    CS, AB = make_dft_matrices(S, Fp, dft_dtype)
    P = prepare_encoder_params(raw_layers, Fp, Hp, H4p, matmul_dtype)

    y = _encoder_call(x, CS, AB, P, bt=bt, cb=cb, h_real=H,
                      mm_dtype=matmul_dtype, vmem_limit=vmem_limit)
    y = y[:, :B, :, :H]                    # single slice at the very end
    if output_all_encoded_layers:
        return [y[i] for i in range(L)]
    return [y[L - 1]]


# ------------------------- pure-JAX reference --------------------------------

def reference_encoder_forward(x, raw_layers, output_all_encoded_layers=True):
    def ln(v, g, b):
        u = v.mean(-1, keepdims=True)
        s = ((v - u) ** 2).mean(-1, keepdims=True)
        return g * (v - u) / jnp.sqrt(s + LN_EPS) + b

    S = x.shape[1]
    outs = []
    h = x
    for raw in raw_layers:
        w = raw["complex_weight"][..., 0] + 1j * raw["complex_weight"][..., 1]
        Xc = jnp.fft.rfft(h, axis=1, norm="ortho") * w[None]
        y = jnp.fft.irfft(Xc, n=S, axis=1, norm="ortho")
        hh = ln(y + h, raw["g1"], raw["be1"])
        t = _gelu(hh @ raw["W1"] + raw["b1"])
        t2 = t @ raw["W2"] + raw["b2"]
        h = ln(t2 + hh, raw["g2"], raw["be2"])
        if output_all_encoded_layers:
            outs.append(h)
    if not output_all_encoded_layers:
        outs.append(h)
    return outs


def make_raw_layer_params(key, H, S):
    F = S // 2 + 1
    H4 = 4 * H
    ks = jax.random.split(key, 5)
    return dict(
        complex_weight=jax.random.normal(ks[0], (F, H, 2), jnp.float32) * 0.02,
        W1=jax.random.normal(ks[1], (H, H4), jnp.float32) * 0.02,
        b1=jax.random.normal(ks[2], (1, H4), jnp.float32) * 0.02,
        W2=jax.random.normal(ks[3], (H4, H), jnp.float32) * 0.02,
        b2=jax.random.normal(ks[4], (1, H), jnp.float32) * 0.02,
        g1=jnp.ones((H,), jnp.float32), be1=jnp.zeros((H,), jnp.float32),
        g2=jnp.ones((H,), jnp.float32), be2=jnp.zeros((H,), jnp.float32),
    )


def _check(outs, ref_outs, tol, tag):
    assert len(outs) == len(ref_outs), tag
    for li, (got, want) in enumerate(zip(outs, ref_outs)):
        got = got.astype(jnp.float32)
        if not jnp.allclose(got, want, rtol=tol, atol=tol):
            err = float(jnp.max(jnp.abs(got - want)))
            raise AssertionError(
                f"Pallas FMLPEncoder mismatch [{tag}] layer {li} max_err={err}")


if __name__ == "__main__":
    B, S, H, n_layers = 2, 8, 32, 2        # batch, max_his_len, hidden_size, layers

    key = jax.random.PRNGKey(0)
    kx, kx2, *lkeys = jax.random.split(key, 2 + n_layers)
    x = jax.random.normal(kx, (B, S, H), jnp.float32)
    attention_mask = jnp.zeros((B, 1, S, S), jnp.float32)   # unused, as in PyTorch

    # (The PyTorch module deep-copies one layer; distinct per-layer params are a
    #  strictly more general test of the same forward semantics.)
    raw_layers = [make_raw_layer_params(k, H, S) for k in lkeys]
    ref_outs = reference_encoder_forward(x, raw_layers)

    # f32 end-to-end: tight check.
    outs = fmlp_encoder_forward(x, attention_mask, raw_layers,
                                matmul_dtype=jnp.float32,
                                act_dtype=jnp.float32, dft_dtype=jnp.float32)
    outs = jax.block_until_ready(outs)
    _check(outs, ref_outs, 2e-3, "f32")

    # bf16 activations + bf16 MXU operands (perf default): loose check.
    outs = fmlp_encoder_forward(x, attention_mask, raw_layers)
    outs = jax.block_until_ready(outs)
    _check(outs, ref_outs, 5e-2, "bf16")

    # output_all_encoded_layers=False path.
    last = fmlp_encoder_forward(x, attention_mask, raw_layers,
                                output_all_encoded_layers=False)
    last = jax.block_until_ready(last)
    _check(last, ref_outs[-1:], 5e-2, "bf16-last")

    # exercise batch padding (B=3 -> Bp=4) and the chunked-MLP pl.loop path.
    x3 = jax.random.normal(kx2, (3, S, H), jnp.float32)
    ref3 = reference_encoder_forward(x3, raw_layers)
    outs3 = fmlp_encoder_forward(x3, jnp.zeros((3, 1, S, S)), raw_layers,
                                 batch_tile=2, chunk_batch=1)
    outs3 = jax.block_until_ready(outs3)
    _check(outs3, ref3, 5e-2, "bf16-padded-chunked")

    print("KERNEL_OK")
</pallas_src>

<mosaic_0001>
module attributes {stable_mosaic.version = 11 : i64} {
  func.func @fmlp_encoder_kernel(%arg0: i32, %arg1: i32, %arg2: memref<1x8x128xf32, #tpu.memory_space<vmem>>, %arg3: memref<16x8xf32, #tpu.memory_space<vmem>>, %arg4: memref<8x16xf32, #tpu.memory_space<vmem>>, %arg5: memref<1x8x128xf32, #tpu.memory_space<vmem>>, %arg6: memref<1x8x128xf32, #tpu.memory_space<vmem>>, %arg7: memref<1x1x128xf32, #tpu.memory_space<vmem>>, %arg8: memref<1x1x128xf32, #tpu.memory_space<vmem>>, %arg9: memref<1x128x128xf32, #tpu.memory_space<vmem>>, %arg10: memref<1x1x128xf32, #tpu.memory_space<vmem>>, %arg11: memref<1x128x128xf32, #tpu.memory_space<vmem>>, %arg12: memref<1x1x128xf32, #tpu.memory_space<vmem>>, %arg13: memref<1x1x128xf32, #tpu.memory_space<vmem>>, %arg14: memref<1x1x128xf32, #tpu.memory_space<vmem>>, %arg15: memref<1x1x8x128xf32, #tpu.memory_space<vmem>>, %arg16: memref<1x8x128xf32, #tpu.memory_space<vmem>>) attributes {dimension_semantics = [#tpu.dimension_semantics<parallel>, #tpu.dimension_semantics<arbitrary>], iteration_bounds = array<i64: 2, 2>, scalar_prefetch = 0 : i64, scratch_operands = 1 : i64, tpu.core_type = #tpu.core_type<tc>, window_params = [{transform_indices = @transform_0, window_bounds = array<i64: 1, 8, 128>}, {pipeline_mode = #tpu.pipeline_mode<synchronous>, transform_indices = @transform_1, window_bounds = array<i64: 16, 8>}, {pipeline_mode = #tpu.pipeline_mode<synchronous>, transform_indices = @transform_2, window_bounds = array<i64: 8, 16>}, {transform_indices = @transform_3, window_bounds = array<i64: 1, 8, 128>}, {transform_indices = @transform_4, window_bounds = array<i64: 1, 8, 128>}, {transform_indices = @transform_5, window_bounds = array<i64: 1, 1, 128>}, {transform_indices = @transform_6, window_bounds = array<i64: 1, 1, 128>}, {transform_indices = @transform_7, window_bounds = array<i64: 1, 128, 128>}, {transform_indices = @transform_8, window_bounds = array<i64: 1, 1, 128>}, {transform_indices = @transform_9, window_bounds = array<i64: 1, 128, 128>}, {transform_indices = @transform_10, window_bounds = array<i64: 1, 1, 128>}, {transform_indices = @transform_11, window_bounds = array<i64: 1, 1, 128>}, {transform_indices = @transform_12, window_bounds = array<i64: 1, 1, 128>}, {transform_indices = @transform_13, window_bounds = array<i64: 1, 1, 8, 128>}]} {
    %c0_i32 = arith.constant 0 : i32
    %0 = arith.cmpi eq, %arg1, %c0_i32 : i32
    %1 = arith.extui %0 : i1 to i32
    %c0_i32_0 = arith.constant 0 : i32
    %2 = arith.cmpi ne, %1, %c0_i32_0 : i32
    scf.if %2 {
      %c0_63 = arith.constant 0 : index
      %c0_64 = arith.constant 0 : index
      %c0_65 = arith.constant 0 : index
      %114 = vector.load %arg2[%c0_63, %c0_64, %c0_65] : memref<1x8x128xf32, #tpu.memory_space<vmem>>, vector<1x8x128xf32>
      %c0_66 = arith.constant 0 : index
      %c0_67 = arith.constant 0 : index
      %c0_68 = arith.constant 0 : index
      %115 = vector.load %arg16[%c0_66, %c0_67, %c0_68] : memref<1x8x128xf32, #tpu.memory_space<vmem>>, vector<1x8x128xf32>
      tpu.vector_store %arg16[%c0_66, %c0_67, %c0_68], %114 {strides = array<i32>} : memref<1x8x128xf32, #tpu.memory_space<vmem>>, vector<1x8x128xf32>,
    } else {
    }
    %c0 = arith.constant 0 : index
    %c0_1 = arith.constant 0 : index
    %3 = vector.load %arg3[%c0, %c0_1] : memref<16x8xf32, #tpu.memory_space<vmem>>, vector<16x8xf32>
    %c0_2 = arith.constant 0 : index
    %c0_3 = arith.constant 0 : index
    %4 = vector.load %arg4[%c0_2, %c0_3] : memref<8x16xf32, #tpu.memory_space<vmem>>, vector<8x16xf32>
    %c0_4 = arith.constant 0 : index
    %c0_5 = arith.constant 0 : index
    %c0_6 = arith.constant 0 : index
    %5 = vector.load %arg5[%c0_4, %c0_5, %c0_6] : memref<1x8x128xf32, #tpu.memory_space<vmem>>, vector<1x8x128xf32>
    %c0_7 = arith.constant 0 : index
    %c0_8 = arith.constant 0 : index
    %c0_9 = arith.constant 0 : index
    %6 = vector.load %arg6[%c0_7, %c0_8, %c0_9] : memref<1x8x128xf32, #tpu.memory_space<vmem>>, vector<1x8x128xf32>
    %c0_10 = arith.constant 0 : index
    %c0_11 = arith.constant 0 : index
    %c0_12 = arith.constant 0 : index
    %7 = vector.load %arg7[%c0_10, %c0_11, %c0_12] : memref<1x1x128xf32, #tpu.memory_space<vmem>>, vector<1x1x128xf32>
    %8 = vector.shape_cast %7 : vector<1x1x128xf32> to vector<1x128xf32>
    %c0_13 = arith.constant 0 : index
    %c0_14 = arith.constant 0 : index
    %c0_15 = arith.constant 0 : index
    %9 = vector.load %arg8[%c0_13, %c0_14, %c0_15] : memref<1x1x128xf32, #tpu.memory_space<vmem>>, vector<1x1x128xf32>
    %10 = vector.shape_cast %9 : vector<1x1x128xf32> to vector<1x128xf32>
    %c0_16 = arith.constant 0 : index
    %c0_17 = arith.constant 0 : index
    %c0_18 = arith.constant 0 : index
    %11 = vector.load %arg9[%c0_16, %c0_17, %c0_18] : memref<1x128x128xf32, #tpu.memory_space<vmem>>, vector<1x128x128xf32>
    %12 = vector.shape_cast %11 : vector<1x128x128xf32> to vector<128x128xf32>
    %c0_19 = arith.constant 0 : index
    %c0_20 = arith.constant 0 : index
    %c0_21 = arith.constant 0 : index
    %13 = vector.load %arg10[%c0_19, %c0_20, %c0_21] : memref<1x1x128xf32, #tpu.memory_space<vmem>>, vector<1x1x128xf32>
    %14 = vector.shape_cast %13 : vector<1x1x128xf32> to vector<1x128xf32>
    %c0_22 = arith.constant 0 : index
    %c0_23 = arith.constant 0 : index
    %c0_24 = arith.constant 0 : index
    %15 = vector.load %arg11[%c0_22, %c0_23, %c0_24] : memref<1x128x128xf32, #tpu.memory_space<vmem>>, vector<1x128x128xf32>
    %16 = vector.shape_cast %15 : vector<1x128x128xf32> to vector<128x128xf32>
    %c0_25 = arith.constant 0 : index
    %c0_26 = arith.constant 0 : index
    %c0_27 = arith.constant 0 : index
    %17 = vector.load %arg12[%c0_25, %c0_26, %c0_27] : memref<1x1x128xf32, #tpu.memory_space<vmem>>, vector<1x1x128xf32>
    %18 = vector.shape_cast %17 : vector<1x1x128xf32> to vector<1x128xf32>
    %c0_28 = arith.constant 0 : index
    %c0_29 = arith.constant 0 : index
    %c0_30 = arith.constant 0 : index
    %19 = vector.load %arg13[%c0_28, %c0_29, %c0_30] : memref<1x1x128xf32, #tpu.memory_space<vmem>>, vector<1x1x128xf32>
    %20 = vector.shape_cast %19 : vector<1x1x128xf32> to vector<1x128xf32>
    %c0_31 = arith.constant 0 : index
    %c0_32 = arith.constant 0 : index
    %c0_33 = arith.constant 0 : index
    %21 = vector.load %arg14[%c0_31, %c0_32, %c0_33] : memref<1x1x128xf32, #tpu.memory_space<vmem>>, vector<1x1x128xf32>
    %22 = vector.shape_cast %21 : vector<1x1x128xf32> to vector<1x128xf32>
    %23 = vector.shape_cast %3 : vector<16x8xf32> to vector<1x16x8xf32>
    %24 = vector.shape_cast %4 : vector<8x16xf32> to vector<1x8x16xf32>
    %c0_34 = arith.constant 0 : index
    %c0_35 = arith.constant 0 : index
    %c0_36 = arith.constant 0 : index
    %25 = vector.load %arg16[%c0_34, %c0_35, %c0_36] : memref<1x8x128xf32, #tpu.memory_space<vmem>>, vector<1x8x128xf32>
    "tpu.trace_start"() <{level = 10 : i32, message = "bfs,bsh->bfh"}> : () -> ()
    %cst = arith.constant dense<0.000000e+00> : vector<1x16x128xf32>
    %26 = tpu.matmul %23, %25, %cst {dimension_numbers = #tpu.dot_dimension_numbers<[2], [1], [1], [2], [0, 0, 0, 1, 1, 2], [0], [0]>} : vector<1x16x8xf32>, vector<1x8x128xf32>, vector<1x16x128xf32> -> vector<1x16x128xf32>
    "tpu.trace_stop"() : () -> ()
    %27 = vector.extract_strided_slice %26 {offsets = [0, 0, 0], sizes = [1, 8, 128], strides = [1, 1, 1]} : vector<1x16x128xf32> to vector<1x8x128xf32>
    %28 = vector.extract_strided_slice %26 {offsets = [0, 8, 0], sizes = [1, 8, 128], strides = [1, 1, 1]} : vector<1x16x128xf32> to vector<1x8x128xf32>
    %29 = arith.mulf %27, %5 : vector<1x8x128xf32>
    %30 = arith.mulf %28, %6 : vector<1x8x128xf32>
    %31 = arith.subf %29, %30 : vector<1x8x128xf32>
    %32 = arith.mulf %27, %6 : vector<1x8x128xf32>
    %33 = arith.mulf %28, %5 : vector<1x8x128xf32>
    %34 = arith.addf %32, %33 : vector<1x8x128xf32>
    %35 = tpu.concatenate %31, %34 in 1 : vector<1x8x128xf32>, vector<1x8x128xf32> -> vector<1x16x128xf32>
    "tpu.trace_start"() <{level = 10 : i32, message = "bsf,bfh->bsh"}> : () -> ()
    %cst_37 = arith.constant dense<0.000000e+00> : vector<1x8x128xf32>
    %36 = tpu.matmul %24, %35, %cst_37 {dimension_numbers = #tpu.dot_dimension_numbers<[2], [1], [1], [2], [0, 0, 0, 1, 1, 2], [0], [0]>} : vector<1x8x16xf32>, vector<1x16x128xf32>, vector<1x8x128xf32> -> vector<1x8x128xf32>
    "tpu.trace_stop"() : () -> ()
    %37 = vector.shape_cast %25 : vector<1x8x128xf32> to vector<8x128xf32>
    %38 = vector.shape_cast %36 : vector<1x8x128xf32> to vector<8x128xf32>
    %39 = arith.addf %38, %37 : vector<8x128xf32>
    %cst_38 = arith.constant dense<0.000000e+00> : vector<8xf32>
    %40 = vector.multi_reduction <add>, %39, %cst_38 [1] : vector<8x128xf32> to vector<8xf32>
    %41 = vector.shape_cast %40 : vector<8xf32> to vector<8x1xf32>
    %cst_39 = arith.constant 3.125000e-02 : f32
    %42 = vector.broadcast %cst_39 : f32 to vector<8x1xf32>
    %43 = arith.mulf %41, %42 : vector<8x1xf32>
    %44 = vector.broadcast %43 : vector<8x1xf32> to vector<8x128xf32>
    %45 = arith.subf %39, %44 : vector<8x128xf32>
    %46 = tpu.iota {dimensions = array<i32: 1>} : vector<1x128xi32>
    %c32_i32 = arith.constant 32 : i32
    %47 = vector.broadcast %c32_i32 : i32 to vector<1x128xi32>
    %48 = arith.cmpi slt, %46, %47 : vector<1x128xi32>
    %cst_40 = arith.constant 0.000000e+00 : f32
    %49 = vector.shape_cast %48 : vector<1x128xi1> to vector<1x128xi1>
    %50 = vector.broadcast %49 : vector<1x128xi1> to vector<8x128xi1>
    %51 = vector.broadcast %cst_40 : f32 to vector<8x128xf32>
    %52 = arith.select %50, %45, %51 : vector<8x128xi1>, vector<8x128xf32>
    %53 = arith.mulf %52, %52 : vector<8x128xf32>
    %cst_41 = arith.constant dense<0.000000e+00> : vector<8xf32>
    %54 = vector.multi_reduction <add>, %53, %cst_41 [1] : vector<8x128xf32> to vector<8xf32>
    %55 = vector.shape_cast %54 : vector<8xf32> to vector<8x1xf32>
    %cst_42 = arith.constant 3.125000e-02 : f32
    %56 = vector.broadcast %cst_42 : f32 to vector<8x1xf32>
    %57 = arith.mulf %55, %56 : vector<8x1xf32>
    %cst_43 = arith.constant 9.99999996E-13 : f32
    %58 = vector.broadcast %cst_43 : f32 to vector<8x1xf32>
    %59 = arith.addf %57, %58 : vector<8x1xf32>
    %60 = math.rsqrt %59 : vector<8x1xf32>
    %61 = vector.broadcast %60 : vector<8x1xf32> to vector<8x128xf32>
    %62 = arith.mulf %45, %61 : vector<8x128xf32>
    %63 = vector.broadcast %8 : vector<1x128xf32> to vector<8x128xf32>
    %64 = arith.mulf %63, %62 : vector<8x128xf32>
    %65 = vector.broadcast %10 : vector<1x128xf32> to vector<8x128xf32>
    %66 = arith.addf %64, %65 : vector<8x128xf32>
    %cst_44 = arith.constant dense<0.000000e+00> : vector<8x128xf32>
    %67 = tpu.matmul %66, %12, %cst_44 {dimension_numbers = #tpu.dot_dimension_numbers<[1], [0], [0], [1], [0, 0, 1, 1], [], []>} : vector<8x128xf32>, vector<128x128xf32>, vector<8x128xf32> -> vector<8x128xf32>
    %68 = vector.broadcast %14 : vector<1x128xf32> to vector<8x128xf32>
    %69 = arith.addf %67, %68 : vector<8x128xf32>
    %cst_45 = arith.constant 5.000000e-01 : f32
    %70 = vector.broadcast %cst_45 : f32 to vector<8x128xf32>
    %71 = arith.mulf %69, %70 : vector<8x128xf32>
    %cst_46 = arith.constant 0.707106769 : f32
    %72 = vector.broadcast %cst_46 : f32 to vector<8x128xf32>
    %73 = arith.mulf %69, %72 : vector<8x128xf32>
    %74 = math.erf %73 : vector<8x128xf32>
    %cst_47 = arith.constant 1.000000e+00 : f32
    %75 = vector.broadcast %cst_47 : f32 to vector<8x128xf32>
    %76 = arith.addf %75, %74 : vector<8x128xf32>
    %77 = arith.mulf %71, %76 : vector<8x128xf32>
    %cst_48 = arith.constant dense<0.000000e+00> : vector<8x128xf32>
    %78 = tpu.matmul %77, %16, %cst_48 {dimension_numbers = #tpu.dot_dimension_numbers<[1], [0], [0], [1], [0, 0, 1, 1], [], []>} : vector<8x128xf32>, vector<128x128xf32>, vector<8x128xf32> -> vector<8x128xf32>
    %79 = vector.broadcast %18 : vector<1x128xf32> to vector<8x128xf32>
    %80 = arith.addf %78, %79 : vector<8x128xf32>
    %81 = arith.addf %80, %66 : vector<8x128xf32>
    %cst_49 = arith.constant dense<0.000000e+00> : vector<8xf32>
    %82 = vector.multi_reduction <add>, %81, %cst_49 [1] : vector<8x128xf32> to vector<8xf32>
    %83 = vector.shape_cast %82 : vector<8xf32> to vector<8x1xf32>
    %cst_50 = arith.constant 3.125000e-02 : f32
    %84 = vector.broadcast %cst_50 : f32 to vector<8x1xf32>
    %85 = arith.mulf %83, %84 : vector<8x1xf32>
    %86 = vector.broadcast %85 : vector<8x1xf32> to vector<8x128xf32>
    %87 = arith.subf %81, %86 : vector<8x128xf32>
    %88 = tpu.iota {dimensions = array<i32: 1>} : vector<1x128xi32>
    %c32_i32_51 = arith.constant 32 : i32
    %89 = vector.broadcast %c32_i32_51 : i32 to vector<1x128xi32>
    %90 = arith.cmpi slt, %88, %89 : vector<1x128xi32>
    %cst_52 = arith.constant 0.000000e+00 : f32
    %91 = vector.shape_cast %90 : vector<1x128xi1> to vector<1x128xi1>
    %92 = vector.broadcast %91 : vector<1x128xi1> to vector<8x128xi1>
    %93 = vector.broadcast %cst_52 : f32 to vector<8x128xf32>
    %94 = arith.select %92, %87, %93 : vector<8x128xi1>, vector<8x128xf32>
    %95 = arith.mulf %94, %94 : vector<8x128xf32>
    %cst_53 = arith.constant dense<0.000000e+00> : vector<8xf32>
    %96 = vector.multi_reduction <add>, %95, %cst_53 [1] : vector<8x128xf32> to vector<8xf32>
    %97 = vector.shape_cast %96 : vector<8xf32> to vector<8x1xf32>
    %cst_54 = arith.constant 3.125000e-02 : f32
    %98 = vector.broadcast %cst_54 : f32 to vector<8x1xf32>
    %99 = arith.mulf %97, %98 : vector<8x1xf32>
    %cst_55 = arith.constant 9.99999996E-13 : f32
    %100 = vector.broadcast %cst_55 : f32 to vector<8x1xf32>
    %101 = arith.addf %99, %100 : vector<8x1xf32>
    %102 = math.rsqrt %101 : vector<8x1xf32>
    %103 = vector.broadcast %102 : vector<8x1xf32> to vector<8x128xf32>
    %104 = arith.mulf %87, %103 : vector<8x128xf32>
    %105 = vector.broadcast %20 : vector<1x128xf32> to vector<8x128xf32>
    %106 = arith.mulf %105, %104 : vector<8x128xf32>
    %107 = vector.broadcast %22 : vector<1x128xf32> to vector<8x128xf32>
    %108 = arith.addf %106, %107 : vector<8x128xf32>
    %109 = vector.shape_cast %108 : vector<8x128xf32> to vector<1x8x128xf32>
    %c0_56 = arith.constant 0 : index
    %c0_57 = arith.constant 0 : index
    %c0_58 = arith.constant 0 : index
    %110 = vector.load %arg16[%c0_56, %c0_57, %c0_58] : memref<1x8x128xf32, #tpu.memory_space<vmem>>, vector<1x8x128xf32>
    tpu.vector_store %arg16[%c0_56, %c0_57, %c0_58], %109 {strides = array<i32>} : memref<1x8x128xf32, #tpu.memory_space<vmem>>, vector<1x8x128xf32>,
    %c0_59 = arith.constant 0 : index
    %c0_60 = arith.constant 0 : index
    %c0_61 = arith.constant 0 : index
    %c0_62 = arith.constant 0 : index
    %111 = vector.load %arg15[%c0_59, %c0_60, %c0_61, %c0_62] : memref<1x1x8x128xf32, #tpu.memory_space<vmem>>, vector<1x1x8x128xf32>
    %112 = vector.shape_cast %111 : vector<1x1x8x128xf32> to vector<1x8x128xf32>
    %113 = vector.shape_cast %109 : vector<1x8x128xf32> to vector<1x1x8x128xf32>
    tpu.vector_store %arg15[%c0_59, %c0_60, %c0_61, %c0_62], %113 {strides = array<i32>} : memref<1x1x8x128xf32, #tpu.memory_space<vmem>>, vector<1x1x8x128xf32>,
    return
  }
  func.func @transform_0(%arg0: i32, %arg1: i32) -> (i32, i32, i32) {
    %c0_i32 = arith.constant 0 : i32
    %c0_i32_0 = arith.constant 0 : i32
    %c0_i32_1 = arith.constant 0 : i32
    return %arg0, %c0_i32, %c0_i32_0 : i32, i32, i32
  }
  func.func @transform_1(%arg0: i32, %arg1: i32) -> (i32, i32) {
    %c0_i32 = arith.constant 0 : i32
    %c0_i32_0 = arith.constant 0 : i32
    %c0_i32_1 = arith.constant 0 : i32
    return %c0_i32, %c0_i32_0 : i32, i32
  }
  func.func @transform_2(%arg0: i32, %arg1: i32) -> (i32, i32) {
    %c0_i32 = arith.constant 0 : i32
    %c0_i32_0 = arith.constant 0 : i32
    %c0_i32_1 = arith.constant 0 : i32
    return %c0_i32, %c0_i32_0 : i32, i32
  }
  func.func @transform_3(%arg0: i32, %arg1: i32) -> (i32, i32, i32) {
    %c0_i32 = arith.constant 0 : i32
    %c0_i32_0 = arith.constant 0 : i32
    %c0_i32_1 = arith.constant 0 : i32
    return %arg1, %c0_i32, %c0_i32_0 : i32, i32, i32
  }
  func.func @transform_4(%arg0: i32, %arg1: i32) -> (i32, i32, i32) {
    %c0_i32 = arith.constant 0 : i32
    %c0_i32_0 = arith.constant 0 : i32
    %c0_i32_1 = arith.constant 0 : i32
    return %arg1, %c0_i32, %c0_i32_0 : i32, i32, i32
  }
  func.func @transform_5(%arg0: i32, %arg1: i32) -> (i32, i32, i32) {
    %c0_i32 = arith.constant 0 : i32
    %c0_i32_0 = arith.constant 0 : i32
    %c0_i32_1 = arith.constant 0 : i32
    return %arg1, %c0_i32, %c0_i32_0 : i32, i32, i32
  }
  func.func @transform_6(%arg0: i32, %arg1: i32) -> (i32, i32, i32) {
    %c0_i32 = arith.constant 0 : i32
    %c0_i32_0 = arith.constant 0 : i32
    %c0_i32_1 = arith.constant 0 : i32
    return %arg1, %c0_i32, %c0_i32_0 : i32, i32, i32
  }
  func.func @transform_7(%arg0: i32, %arg1: i32) -> (i32, i32, i32) {
    %c0_i32 = arith.constant 0 : i32
    %c0_i32_0 = arith.constant 0 : i32
    %c0_i32_1 = arith.constant 0 : i32
    return %arg1, %c0_i32, %c0_i32_0 : i32, i32, i32
  }
  func.func @transform_8(%arg0: i32, %arg1: i32) -> (i32, i32, i32) {
    %c0_i32 = arith.constant 0 : i32
    %c0_i32_0 = arith.constant 0 : i32
    %c0_i32_1 = arith.constant 0 : i32
    return %arg1, %c0_i32, %c0_i32_0 : i32, i32, i32
  }
  func.func @transform_9(%arg0: i32, %arg1: i32) -> (i32, i32, i32) {
    %c0_i32 = arith.constant 0 : i32
    %c0_i32_0 = arith.constant 0 : i32
    %c0_i32_1 = arith.constant 0 : i32
    return %arg1, %c0_i32, %c0_i32_0 : i32, i32, i32
  }
  func.func @transform_10(%arg0: i32, %arg1: i32) -> (i32, i32, i32) {
    %c0_i32 = arith.constant 0 : i32
    %c0_i32_0 = arith.constant 0 : i32
    %c0_i32_1 = arith.constant 0 : i32
    return %arg1, %c0_i32, %c0_i32_0 : i32, i32, i32
  }
  func.func @transform_11(%arg0: i32, %arg1: i32) -> (i32, i32, i32) {
    %c0_i32 = arith.constant 0 : i32
    %c0_i32_0 = arith.constant 0 : i32
    %c0_i32_1 = arith.constant 0 : i32
    return %arg1, %c0_i32, %c0_i32_0 : i32, i32, i32
  }
  func.func @transform_12(%arg0: i32, %arg1: i32) -> (i32, i32, i32) {
    %c0_i32 = arith.constant 0 : i32
    %c0_i32_0 = arith.constant 0 : i32
    %c0_i32_1 = arith.constant 0 : i32
    return %arg1, %c0_i32, %c0_i32_0 : i32, i32, i32
  }
  func.func @transform_13(%arg0: i32, %arg1: i32) -> (i32, i32, i32, i32) {
    %c0_i32 = arith.constant 0 : i32
    %c0_i32_0 = arith.constant 0 : i32
    %c0_i32_1 = arith.constant 0 : i32
    return %arg1, %arg0, %c0_i32, %c0_i32_0 : i32, i32, i32, i32
  }
}

</mosaic_0001>

<llo_original>
// kernel: tpu_custom_call.1
$region0: #{tpu_custom_call.1}
  #allocation0 [shape = 'u32[]', space=smem, size = 0x4, offset = 0x4, fixed_abs, tag = 'smem constant byte address 0x4 - core index']
  #allocation1 [shape = 'u32[144,128]{1,0:T(1,128)}', space=vmem, size = 0x12000, scoped, tag = 'internal scratch']
  #allocation2 [shape = 'f32[1,8,128]{2,1,0:T(8,128)}', space=vmem, size = 0x1000, scoped, tag = 'scratch operand']
  %s0 = inlined_call_operand.vmem [shape: f32[2,8,128], index: 0, kind: input, shape index: {}]
  %s1 = inlined_call_operand.vmem [shape: f32[16,8], index: 1, kind: input, shape index: {}]
  %s2 = inlined_call_operand.hbm [shape: f32[8,16], index: 2, kind: input, shape index: {}]
  %s3 = inlined_call_operand.vmem [shape: f32[2,8,128], index: 3, kind: input, shape index: {}]
  %s4 = inlined_call_operand.hbm [shape: f32[2,8,128], index: 4, kind: input, shape index: {}]
  %s5 = inlined_call_operand.vmem [shape: f32[2,1,128], index: 5, kind: input, shape index: {}]
  %s6 = inlined_call_operand.vmem [shape: f32[2,1,128], index: 6, kind: input, shape index: {}]
  %s7 = inlined_call_operand.hbm [shape: f32[2,128,128], index: 7, kind: input, shape index: {}]
  %s8 = inlined_call_operand.vmem [shape: f32[2,1,128], index: 8, kind: input, shape index: {}]
  %s9 = inlined_call_operand.hbm [shape: f32[2,128,128], index: 9, kind: input, shape index: {}]
  %s10 = inlined_call_operand.vmem [shape: f32[2,1,128], index: 10, kind: input, shape index: {}]
  %s11 = inlined_call_operand.vmem [shape: f32[2,1,128], index: 11, kind: input, shape index: {}]
  %s12 = inlined_call_operand.vmem [shape: f32[2,1,128], index: 12, kind: input, shape index: {}]
  %s13 = inlined_call_operand.hbm [shape: f32[2,2,8,128], index: 13, kind: output, shape index: {}]
  %s14 = sld [smem:[#allocation0]]
  $region105: #{tpu_custom_call.1} parent=0
    _
  %s16 = ssub.s32 1, %s14
  %s17 = scalar_select 0, %s16, %s14
  $region1: #{tpu_custom_call.1} parent=0
    #allocation3 [shape = 'u8[4096]{0}', space=vmem, size = 0x1000, scoped, tag = 'input window, operand 2, single buffered']
    #allocation4 [shape = 's32[2]{0}', space=sflag, size = 0x8, scoped, tag = 'scoped memory for tpu_custom_call.1']
    #allocation5 [shape = 's32[2]{0}', space=sflag, size = 0x8, scoped, tag = 'scoped memory for tpu_custom_call.1']
    #allocation6 [shape = 'u8[8192]{0}', space=vmem, size = 0x2000, scoped, tag = 'input window, operand 4']
    #allocation7 [shape = 's32[2]{0}', space=sflag, size = 0x8, scoped, tag = 'scoped memory for tpu_custom_call.1']
    #allocation8 [shape = 'u8[131072]{0}', space=vmem, size = 0x20000, scoped, tag = 'input window, operand 7']
    #allocation9 [shape = 'u8[131072]{0}', space=vmem, size = 0x20000, scoped, tag = 'input window, operand 9']
    #allocation10 [shape = 's32[2]{0}', space=sflag, size = 0x8, scoped, tag = 'scoped memory for tpu_custom_call.1']
    #allocation11 [shape = 'u8[8192]{0}', space=vmem, size = 0x2000, scoped, tag = 'output window, operand 0']
    %18 = vsyncpa [#allocation4], 0
    %19 = vsyncpa [#allocation7], 0
    %s20 = scalar_lea.sflag [#allocation7], 1
    %21 = vsyncpa %s20, 0
    %22 = vsyncpa [#allocation10], 0
    %s23 = scalar_lea.sflag [#allocation10], 1
    %24 = vsyncpa %s23, 0
    %25 = vsyncpa [#allocation5], 0
    %s26 = scalar_lea.sflag [#allocation5], 1
    %27 = vsyncpa %s26, 0
    loop: start=0, step=1, limit=6
    $region2: #{tpu_custom_call.1} parent=1 // loop_pre_header
      _
    $region3: #{tpu_custom_call.1} parent=1 // loop_header
      %s29 = sphi 0, %s33
      %p30 = scmp.ge.s32.totalorder %s29, 6
      %s36 = sphi 0, %s48
      %s37 = sphi 0, %s44
      %s38 = sphi 0, %s36
      %s39 = sphi 0, %s37
      %s40 = sphi 0, %s38
      %s41 = sphi 0, %s39
      %s51 = sphi 0, %s53
      %s54 = sphi 0, %s51
      %s55 = sphi 0, %s54
      %s71 = sphi 0, %s55
      %s75 = sphi 0, %s75
      %s77 = sphi 0, %s75
      %s78 = sphi 0, %s77
      %s92 = sphi 0, %s78
      %s96 = sphi 0, %s96
      %s98 = sphi 0, %s96
      %s99 = sphi 0, %s98
      %s113 = sphi 0, %s99
      %s119 = sphi 0, %s121
      %s122 = sphi 0, %s119
      %s123 = sphi 0, %s122
      %s139 = sphi 0, %s123
      %s145 = sphi 0, %s147
      %s148 = sphi 0, %s145
      %s149 = sphi 0, %s148
      %s165 = sphi 0, %s149
      %s171 = sphi 0, %s173
      %s174 = sphi 0, %s171
      %s175 = sphi 0, %s174
      %s191 = sphi 0, %s175
      %s197 = sphi 0, %s199
      %s200 = sphi 0, %s197
      %s201 = sphi 0, %s200
      %s217 = sphi 0, %s201
      %s223 = sphi 0, %s225
      %s226 = sphi 0, %s223
      %s227 = sphi 0, %s226
      %s243 = sphi 0, %s227
      %s249 = sphi 0, %s251
      %s252 = sphi 0, %s249
      %s253 = sphi 0, %s252
      %s269 = sphi 0, %s253
      %s275 = sphi 0, %s277
      %s278 = sphi 0, %s275
      %s279 = sphi 0, %s278
      %s295 = sphi 0, %s279
      %s301 = sphi 0, %s303
      %s304 = sphi 0, %s301
      %s305 = sphi 0, %s304
      %s321 = sphi 0, %s305
      %s327 = sphi 0, %s329
      %s330 = sphi 0, %s327
      %s331 = sphi 0, %s330
      %s347 = sphi 0, %s331
      %s353 = sphi 0, %s355
      %s356 = sphi 0, %s353
      %s357 = sphi 0, %s356
      %s373 = sphi 0, %s357
      %s381 = sphi 0, %s383
      %s384 = sphi 0, %s381
      %s385 = sphi 0, %s384
      %s401 = sphi 0, %s385
    $region4: #{tpu_custom_call.1} parent=1 // loop_header_branch
      %32 = sbr.rel (%p30) target = $region8
    $region5: #{tpu_custom_call.1} parent=1 // loop_body
      %s34 = ssub.s32 %s29, 1
      %s35 = ssub.s32 %s29, 2
      %s42 = sadd.s32 1, %s37
      %p43 = scmp.ge.s32.totalorder %s42, 2
      %s44 = scalar_select %p43, 0, %s42
      %s45 = sadd.s32 1, %s36
      %s46 = scalar_select %p43, %s45, %s36
      %p47 = scmp.ge.s32.totalorder %s46, 2
      %s48 = scalar_select %p47, 0, %s46
      %s49 = ssub.s32 %s36, %s48
      %p50 = scmp.eq.s32.totalorder %s49, 0
      %s52 = sadd.s32 %s51, 1
      %s53 = scalar_select %p50, %s51, %s52
      %p56 = pneg %p50
      %p57 = scmp.eq.s32.totalorder %s29, 3
      %p58 = por %p56, %p57
      %p59 = scmp.ne.s32.totalorder %s51, %s54
      %p60 = scmp.eq.s32.totalorder %s29, 0
      %p61 = por %p59, %p60
      %p62 = scmp.ne.s32.totalorder %s51, %s54
      %p63 = scmp.eq.s32.totalorder %s34, 3
      %p64 = por %p62, %p63
      %p65 = scmp.ne.s32.totalorder %s54, %s55
      %p66 = scmp.eq.s32.totalorder %s34, 0
      %p67 = por %p65, %p66
      %p68 = scmp.ne.s32.totalorder %s54, %s55
      %p69 = scmp.eq.s32.totalorder %s35, 3
      %p70 = por %p68, %p69
      %p72 = scmp.ne.s32.totalorder %s55, %s71
      %p73 = scmp.eq.s32.totalorder %s35, 0
      %p74 = por %p72, %p73
      %s76 = sadd.s32 %s75, 1
      %p79 = scmp.eq.s32.totalorder %s29, 3
      %p80 = scmp.ne.s32.totalorder %s75, %s77
      %p81 = scmp.eq.s32.totalorder %s29, 0
      %p82 = por %p80, %p81
      %p83 = scmp.ne.s32.totalorder %s75, %s77
      %p84 = scmp.eq.s32.totalorder %s34, 3
      %p85 = por %p83, %p84
      %p86 = scmp.ne.s32.totalorder %s77, %s78
      %p87 = scmp.eq.s32.totalorder %s34, 0
      %p88 = por %p86, %p87
      %p89 = scmp.ne.s32.totalorder %s77, %s78
      %p90 = scmp.eq.s32.totalorder %s35, 3
      %p91 = por %p89, %p90
      %p93 = scmp.ne.s32.totalorder %s78, %s92
      %p94 = scmp.eq.s32.totalorder %s35, 0
      %p95 = por %p93, %p94
      %s97 = sadd.s32 %s96, 1
      %p100 = scmp.eq.s32.totalorder %s29, 3
      %p101 = scmp.ne.s32.totalorder %s96, %s98
      %p102 = scmp.eq.s32.totalorder %s29, 0
      %p103 = por %p101, %p102
      %p104 = scmp.ne.s32.totalorder %s96, %s98
      %p105 = scmp.eq.s32.totalorder %s34, 3
      %p106 = por %p104, %p105
      %p107 = scmp.ne.s32.totalorder %s98, %s99
      %p108 = scmp.eq.s32.totalorder %s34, 0
      %p109 = por %p107, %p108
      %p110 = scmp.ne.s32.totalorder %s98, %s99
      %p111 = scmp.eq.s32.totalorder %s35, 3
      %p112 = por %p110, %p111
      %p114 = scmp.ne.s32.totalorder %s99, %s113
      %p115 = scmp.eq.s32.totalorder %s35, 0
      %p116 = por %p114, %p115
      %s117 = ssub.s32 %s37, %s44
      %p118 = scmp.eq.s32.totalorder %s117, 0
      %s120 = sadd.s32 %s119, 1
      %s121 = scalar_select %p118, %s119, %s120
      %p124 = pneg %p118
      %p125 = scmp.eq.s32.totalorder %s29, 3
      %p126 = por %p124, %p125
      %p127 = scmp.ne.s32.totalorder %s119, %s122
      %p128 = scmp.eq.s32.totalorder %s29, 0
      %p129 = por %p127, %p128
      %p130 = scmp.ne.s32.totalorder %s119, %s122
      %p131 = scmp.eq.s32.totalorder %s34, 3
      %p132 = por %p130, %p131
      %p133 = scmp.ne.s32.totalorder %s122, %s123
      %p134 = scmp.eq.s32.totalorder %s34, 0
      %p135 = por %p133, %p134
      %p136 = scmp.ne.s32.totalorder %s122, %s123
      %p137 = scmp.eq.s32.totalorder %s35, 3
      %p138 = por %p136, %p137
      %p140 = scmp.ne.s32.totalorder %s123, %s139
      %p141 = scmp.eq.s32.totalorder %s35, 0
      %p142 = por %p140, %p141
      %s143 = ssub.s32 %s37, %s44
      %p144 = scmp.eq.s32.totalorder %s143, 0
      %s146 = sadd.s32 %s145, 1
      %s147 = scalar_select %p144, %s145, %s146
      %p150 = pneg %p144
      %p151 = scmp.eq.s32.totalorder %s29, 3
      %p152 = por %p150, %p151
      %p153 = scmp.ne.s32.totalorder %s145, %s148
      %p154 = scmp.eq.s32.totalorder %s29, 0
      %p155 = por %p153, %p154
      %p156 = scmp.ne.s32.totalorder %s145, %s148
      %p157 = scmp.eq.s32.totalorder %s34, 3
      %p158 = por %p156, %p157
      %p159 = scmp.ne.s32.totalorder %s148, %s149
      %p160 = scmp.eq.s32.totalorder %s34, 0
      %p161 = por %p159, %p160
      %p162 = scmp.ne.s32.totalorder %s148, %s149
      %p163 = scmp.eq.s32.totalorder %s35, 3
      %p164 = por %p162, %p163
      %p166 = scmp.ne.s32.totalorder %s149, %s165
      %p167 = scmp.eq.s32.totalorder %s35, 0
      %p168 = por %p166, %p167
      %s169 = ssub.s32 %s37, %s44
      %p170 = scmp.eq.s32.totalorder %s169, 0
      %s172 = sadd.s32 %s171, 1
      %s173 = scalar_select %p170, %s171, %s172
      %p176 = pneg %p170
      %p177 = scmp.eq.s32.totalorder %s29, 3
      %p178 = por %p176, %p177
      %p179 = scmp.ne.s32.totalorder %s171, %s174
      %p180 = scmp.eq.s32.totalorder %s29, 0
      %p181 = por %p179, %p180
      %p182 = scmp.ne.s32.totalorder %s171, %s174
      %p183 = scmp.eq.s32.totalorder %s34, 3
      %p184 = por %p182, %p183
      %p185 = scmp.ne.s32.totalorder %s174, %s175
      %p186 = scmp.eq.s32.totalorder %s34, 0
      %p187 = por %p185, %p186
      %p188 = scmp.ne.s32.totalorder %s174, %s175
      %p189 = scmp.eq.s32.totalorder %s35, 3
      %p190 = por %p188, %p189
      %p192 = scmp.ne.s32.totalorder %s175, %s191
      %p193 = scmp.eq.s32.totalorder %s35, 0
      %p194 = por %p192, %p193
      %s195 = ssub.s32 %s37, %s44
      %p196 = scmp.eq.s32.totalorder %s195, 0
      %s198 = sadd.s32 %s197, 1
      %s199 = scalar_select %p196, %s197, %s198
      %p202 = pneg %p196
      %p203 = scmp.eq.s32.totalorder %s29, 3
      %p204 = por %p202, %p203
      %p205 = scmp.ne.s32.totalorder %s197, %s200
      %p206 = scmp.eq.s32.totalorder %s29, 0
      %p207 = por %p205, %p206
      %p208 = scmp.ne.s32.totalorder %s197, %s200
      %p209 = scmp.eq.s32.totalorder %s34, 3
      %p210 = por %p208, %p209
      %p211 = scmp.ne.s32.totalorder %s200, %s201
      %p212 = scmp.eq.s32.totalorder %s34, 0
      %p213 = por %p211, %p212
      %p214 = scmp.ne.s32.totalorder %s200, %s201
      %p215 = scmp.eq.s32.totalorder %s35, 3
      %p216 = por %p214, %p215
      %p218 = scmp.ne.s32.totalorder %s201, %s217
      %p219 = scmp.eq.s32.totalorder %s35, 0
      %p220 = por %p218, %p219
      %s221 = ssub.s32 %s37, %s44
      %p222 = scmp.eq.s32.totalorder %s221, 0
      %s224 = sadd.s32 %s223, 1
      %s225 = scalar_select %p222, %s223, %s224
      %p228 = pneg %p222
      %p229 = scmp.eq.s32.totalorder %s29, 3
      %p230 = por %p228, %p229
      %p231 = scmp.ne.s32.totalorder %s223, %s226
      %p232 = scmp.eq.s32.totalorder %s29, 0
      %p233 = por %p231, %p232
      %p234 = scmp.ne.s32.totalorder %s223, %s226
      %p235 = scmp.eq.s32.totalorder %s34, 3
      %p236 = por %p234, %p235
      %p237 = scmp.ne.s32.totalorder %s226, %s227
      %p238 = scmp.eq.s32.totalorder %s34, 0
      %p239 = por %p237, %p238
      %p240 = scmp.ne.s32.totalorder %s226, %s227
      %p241 = scmp.eq.s32.totalorder %s35, 3
      %p242 = por %p240, %p241
      %p244 = scmp.ne.s32.totalorder %s227, %s243
      %p245 = scmp.eq.s32.totalorder %s35, 0
      %p246 = por %p244, %p245
      %s247 = ssub.s32 %s37, %s44
      %p248 = scmp.eq.s32.totalorder %s247, 0
      %s250 = sadd.s32 %s249, 1
      %s251 = scalar_select %p248, %s249, %s250
      %p254 = pneg %p248
      %p255 = scmp.eq.s32.totalorder %s29, 3
      %p256 = por %p254, %p255
      %p257 = scmp.ne.s32.totalorder %s249, %s252
      %p258 = scmp.eq.s32.totalorder %s29, 0
      %p259 = por %p257, %p258
      %p260 = scmp.ne.s32.totalorder %s249, %s252
      %p261 = scmp.eq.s32.totalorder %s34, 3
      %p262 = por %p260, %p261
      %p263 = scmp.ne.s32.totalorder %s252, %s253
      %p264 = scmp.eq.s32.totalorder %s34, 0
      %p265 = por %p263, %p264
      %p266 = scmp.ne.s32.totalorder %s252, %s253
      %p267 = scmp.eq.s32.totalorder %s35, 3
      %p268 = por %p266, %p267
      %p270 = scmp.ne.s32.totalorder %s253, %s269
      %p271 = scmp.eq.s32.totalorder %s35, 0
      %p272 = por %p270, %p271
      %s273 = ssub.s32 %s37, %s44
      %p274 = scmp.eq.s32.totalorder %s273, 0
      %s276 = sadd.s32 %s275, 1
      %s277 = scalar_select %p274, %s275, %s276
      %p280 = pneg %p274
      %p281 = scmp.eq.s32.totalorder %s29, 3
      %p282 = por %p280, %p281
      %p283 = scmp.ne.s32.totalorder %s275, %s278
      %p284 = scmp.eq.s32.totalorder %s29, 0
      %p285 = por %p283, %p284
      %p286 = scmp.ne.s32.totalorder %s275, %s278
      %p287 = scmp.eq.s32.totalorder %s34, 3
      %p288 = por %p286, %p287
      %p289 = scmp.ne.s32.totalorder %s278, %s279
      %p290 = scmp.eq.s32.totalorder %s34, 0
      %p291 = por %p289, %p290
      %p292 = scmp.ne.s32.totalorder %s278, %s279
      %p293 = scmp.eq.s32.totalorder %s35, 3
      %p294 = por %p292, %p293
      %p296 = scmp.ne.s32.totalorder %s279, %s295
      %p297 = scmp.eq.s32.totalorder %s35, 0
      %p298 = por %p296, %p297
      %s299 = ssub.s32 %s37, %s44
      %p300 = scmp.eq.s32.totalorder %s299, 0
      %s302 = sadd.s32 %s301, 1
      %s303 = scalar_select %p300, %s301, %s302
      %p306 = pneg %p300
      %p307 = scmp.eq.s32.totalorder %s29, 3
      %p308 = por %p306, %p307
      %p309 = scmp.ne.s32.totalorder %s301, %s304
      %p310 = scmp.eq.s32.totalorder %s29, 0
      %p311 = por %p309, %p310
      %p312 = scmp.ne.s32.totalorder %s301, %s304
      %p313 = scmp.eq.s32.totalorder %s34, 3
      %p314 = por %p312, %p313
      %p315 = scmp.ne.s32.totalorder %s304, %s305
      %p316 = scmp.eq.s32.totalorder %s34, 0
      %p317 = por %p315, %p316
      %p318 = scmp.ne.s32.totalorder %s304, %s305
      %p319 = scmp.eq.s32.totalorder %s35, 3
      %p320 = por %p318, %p319
      %p322 = scmp.ne.s32.totalorder %s305, %s321
      %p323 = scmp.eq.s32.totalorder %s35, 0
      %p324 = por %p322, %p323
      %s325 = ssub.s32 %s37, %s44
      %p326 = scmp.eq.s32.totalorder %s325, 0
      %s328 = sadd.s32 %s327, 1
      %s329 = scalar_select %p326, %s327, %s328
      %p332 = pneg %p326
      %p333 = scmp.eq.s32.totalorder %s29, 3
      %p334 = por %p332, %p333
      %p335 = scmp.ne.s32.totalorder %s327, %s330
      %p336 = scmp.eq.s32.totalorder %s29, 0
      %p337 = por %p335, %p336
      %p338 = scmp.ne.s32.totalorder %s327, %s330
      %p339 = scmp.eq.s32.totalorder %s34, 3
      %p340 = por %p338, %p339
      %p341 = scmp.ne.s32.totalorder %s330, %s331
      %p342 = scmp.eq.s32.totalorder %s34, 0
      %p343 = por %p341, %p342
      %p344 = scmp.ne.s32.totalorder %s330, %s331
      %p345 = scmp.eq.s32.totalorder %s35, 3
      %p346 = por %p344, %p345
      %p348 = scmp.ne.s32.totalorder %s331, %s347
      %p349 = scmp.eq.s32.totalorder %s35, 0
      %p350 = por %p348, %p349
      %s351 = ssub.s32 %s37, %s44
      %p352 = scmp.eq.s32.totalorder %s351, 0
      %s354 = sadd.s32 %s353, 1
      %s355 = scalar_select %p352, %s353, %s354
      %p358 = pneg %p352
      %p359 = scmp.eq.s32.totalorder %s29, 3
      %p360 = por %p358, %p359
      %p361 = scmp.ne.s32.totalorder %s353, %s356
      %p362 = scmp.eq.s32.totalorder %s29, 0
      %p363 = por %p361, %p362
      %p364 = scmp.ne.s32.totalorder %s353, %s356
      %p365 = scmp.eq.s32.totalorder %s34, 3
      %p366 = por %p364, %p365
      %p367 = scmp.ne.s32.totalorder %s356, %s357
      %p368 = scmp.eq.s32.totalorder %s34, 0
      %p369 = por %p367, %p368
      %p370 = scmp.ne.s32.totalorder %s356, %s357
      %p371 = scmp.eq.s32.totalorder %s35, 3
      %p372 = por %p370, %p371
      %p374 = scmp.ne.s32.totalorder %s357, %s373
      %p375 = scmp.eq.s32.totalorder %s35, 0
      %p376 = por %p374, %p375
      %s377 = ssub.s32 %s37, %s44
      %s378 = ssub.s32 %s36, %s48
      %s379 = sor.u32 %s377, %s378
      %p380 = scmp.eq.s32.totalorder %s379, 0
      %s382 = sadd.s32 %s381, 1
      %s383 = scalar_select %p380, %s381, %s382
      %p386 = pneg %p380
      %p387 = scmp.eq.s32.totalorder %s29, 3
      %p388 = por %p386, %p387
      %p389 = scmp.ne.s32.totalorder %s381, %s384
      %p390 = scmp.eq.s32.totalorder %s29, 0
      %p391 = por %p389, %p390
      %p392 = scmp.ne.s32.totalorder %s381, %s384
      %p393 = scmp.eq.s32.totalorder %s34, 3
      %p394 = por %p392, %p393
      %p395 = scmp.ne.s32.totalorder %s384, %s385
      %p396 = scmp.eq.s32.totalorder %s34, 0
      %p397 = por %p395, %p396
      %p398 = scmp.ne.s32.totalorder %s384, %s385
      %p399 = scmp.eq.s32.totalorder %s35, 3
      %p400 = por %p398, %p399
      %p402 = scmp.ne.s32.totalorder %s385, %s401
      %p403 = scmp.eq.s32.totalorder %s35, 0
      %p404 = por %p402, %p403
      %p405 = scmp.le.s32.totalorder 1, %s29
      %p406 = scmp.lt.s32.totalorder %s29, 5
      %p407 = pnand %p405, %p406
      %p408 = pneg %p407
      // Predicated region
      $region9: #{tpu_custom_call.1} parent=5 // pred_check
        _
      $region10: #{tpu_custom_call.1} parent=5 // pred_check_branch
        %410 = sbr.rel (%p407) target = $region12
      $region11: #{tpu_custom_call.1} parent=5 // pred_region
        %s411 = ssub.s32 %s29, 1
        // Predicated region
        $region13: #{tpu_custom_call.1} parent=11 // pred_check
          %p412 = pneg %p88
        $region14: #{tpu_custom_call.1} parent=11 // pred_check_branch
          %414 = sbr.rel (%p412) target = $region16
        $region15: #{tpu_custom_call.1} parent=11 // pred_region
          _
        $region16: #{tpu_custom_call.1} parent=11 // pred_fallthru
          _
        // Predicated region
        $region17: #{tpu_custom_call.1} parent=11 // pred_check
          %p415 = pneg %p109
        $region18: #{tpu_custom_call.1} parent=11 // pred_check_branch
          %417 = sbr.rel (%p415) target = $region20
        $region19: #{tpu_custom_call.1} parent=11 // pred_region
          %s419 = ssub.s32 128, 128
          %420 = vsyncadd [#allocation4], %s419
          %s422 = sshll.u32 [#allocation3], 4
          %s423 = int_to_ptr.vmem [resolvable:$true] %s422
          %425 = dma.hbm_to_vmem [thread:$0]  %s2, 128, %s423, [#allocation4]
        $region20: #{tpu_custom_call.1} parent=11 // pred_fallthru
          _
      $region12: #{tpu_custom_call.1} parent=5 // pred_fallthru
        _
      %p426 = scmp.lt.s32.totalorder %s29, 4
      // Predicated region
      $region21: #{tpu_custom_call.1} parent=5 // pred_check
        %p427 = pneg %p426
      $region22: #{tpu_custom_call.1} parent=5 // pred_check_branch
        %429 = sbr.rel (%p427) target = $region24
      $region23: #{tpu_custom_call.1} parent=5 // pred_region
        // Predicated region
        $region25: #{tpu_custom_call.1} parent=23 // pred_check
          %p430 = pneg %p61
        $region26: #{tpu_custom_call.1} parent=23 // pred_check_branch
          %432 = sbr.rel (%p430) target = $region28
        $region27: #{tpu_custom_call.1} parent=23 // pred_region
          %p433 = scmp.lt.s32.totalorder %s36, 1
          %s434 = scalar_select %p433, %s36, 1
          %s435 = smul.addr %s434, 8
          %s436 = scalar_lea.vmem %s0, %s435
        $region28: #{tpu_custom_call.1} parent=23 // pred_fallthru
          _
        // Predicated region
        $region29: #{tpu_custom_call.1} parent=23 // pred_check
          %p437 = pneg %p129
        $region30: #{tpu_custom_call.1} parent=23 // pred_check_branch
          %439 = sbr.rel (%p437) target = $region32
        $region31: #{tpu_custom_call.1} parent=23 // pred_region
          %p440 = scmp.lt.s32.totalorder %s37, 1
          %s441 = scalar_select %p440, %s37, 1
          %s442 = smul.addr %s441, 8
          %s443 = scalar_lea.vmem %s3, %s442
        $region32: #{tpu_custom_call.1} parent=23 // pred_fallthru
          _
        // Predicated region
        $region33: #{tpu_custom_call.1} parent=23 // pred_check
          %p444 = pneg %p155
        $region34: #{tpu_custom_call.1} parent=23 // pred_check_branch
          %446 = sbr.rel (%p444) target = $region36
        $region35: #{tpu_custom_call.1} parent=23 // pred_region
          %s447 = sand.u32 %s29, 1
          %s448 = scalar_lea.sflag [#allocation7], %s447
          %s449 = sand.u32 %s145, 1
          %s450 = smul.addr %s449, 8
          %s451 = scalar_lea.vmem [#allocation6], %s450
          %s453 = ssub.s32 128, 128
          %454 = vsyncadd %s448, %s453
          %s455 = smul.addr %s37, 128
          %s456 = scalar_lea.hbm %s4, %s455
          %s458 = sshll.u32 %s451, 4
          %s459 = int_to_ptr.vmem [resolvable:$true] %s458
          %461 = dma.hbm_to_vmem [thread:$0]  %s456, 128, %s459, %s448
        $region36: #{tpu_custom_call.1} parent=23 // pred_fallthru
          _
        // Predicated region
        $region37: #{tpu_custom_call.1} parent=23 // pred_check
          %p462 = pneg %p181
        $region38: #{tpu_custom_call.1} parent=23 // pred_check_branch
          %464 = sbr.rel (%p462) target = $region40
        $region39: #{tpu_custom_call.1} parent=23 // pred_region
          %p465 = scmp.lt.s32.totalorder %s37, 1
          %s466 = scalar_select %p465, %s37, 1
          %s467 = scalar_lea.vmem %s5, %s466
        $region40: #{tpu_custom_call.1} parent=23 // pred_fallthru
          _
        // Predicated region
        $region41: #{tpu_custom_call.1} parent=23 // pred_check
          %p468 = pneg %p207
        $region42: #{tpu_custom_call.1} parent=23 // pred_check_branch
          %470 = sbr.rel (%p468) target = $region44
        $region43: #{tpu_custom_call.1} parent=23 // pred_region
          %p471 = scmp.lt.s32.totalorder %s37, 1
          %s472 = scalar_select %p471, %s37, 1
          %s473 = scalar_lea.vmem %s6, %s472
        $region44: #{tpu_custom_call.1} parent=23 // pred_fallthru
          _
        // Predicated region
        $region45: #{tpu_custom_call.1} parent=23 // pred_check
          %p474 = pneg %p233
        $region46: #{tpu_custom_call.1} parent=23 // pred_check_branch
          %476 = sbr.rel (%p474) target = $region48
        $region47: #{tpu_custom_call.1} parent=23 // pred_region
          %s477 = sand.u32 %s29, 1
          %s478 = scalar_lea.sflag [#allocation7], %s477
          %s479 = sand.u32 %s223, 1
          %s480 = smul.addr %s479, 128
          %s481 = scalar_lea.vmem [#allocation8], %s480
          %s483 = ssub.s32 2048, 2048
          %484 = vsyncadd %s478, %s483
          %s485 = smul.addr %s37, 16
          %s486 = smul.addr %s485, 128
          %s487 = scalar_lea.hbm %s7, %s486
          %s488 = sshll.u32 %s481, 4
          %s489 = int_to_ptr.vmem [resolvable:$true] %s488
          %494 = dma.hbm_to_vmem [thread:$0]  %s487, 2048, %s489, %s478, 128, 128, 8
        $region48: #{tpu_custom_call.1} parent=23 // pred_fallthru
          _
        // Predicated region
        $region49: #{tpu_custom_call.1} parent=23 // pred_check
          %p495 = pneg %p259
        $region50: #{tpu_custom_call.1} parent=23 // pred_check_branch
          %497 = sbr.rel (%p495) target = $region52
        $region51: #{tpu_custom_call.1} parent=23 // pred_region
          %p498 = scmp.lt.s32.totalorder %s37, 1
          %s499 = scalar_select %p498, %s37, 1
          %s500 = scalar_lea.vmem %s8, %s499
        $region52: #{tpu_custom_call.1} parent=23 // pred_fallthru
          _
        // Predicated region
        $region53: #{tpu_custom_call.1} parent=23 // pred_check
          %p501 = pneg %p285
        $region54: #{tpu_custom_call.1} parent=23 // pred_check_branch
          %503 = sbr.rel (%p501) target = $region56
        $region55: #{tpu_custom_call.1} parent=23 // pred_region
          %s504 = sand.u32 %s275, 1
          %s505 = scalar_lea.sflag [#allocation10], %s504
          %s506 = sand.u32 %s275, 1
          %s507 = smul.addr %s506, 128
          %s508 = scalar_lea.vmem [#allocation9], %s507
          %s510 = ssub.s32 2048, 2048
          %511 = vsyncadd %s505, %s510
          %s512 = smul.addr %s37, 16
          %s513 = smul.addr %s512, 128
          %s514 = scalar_lea.hbm %s9, %s513
          %s515 = sshll.u32 %s508, 4
          %s516 = int_to_ptr.vmem [resolvable:$true] %s515
          %521 = dma.hbm_to_vmem [thread:$0]  %s514, 2048, %s516, %s505, 128, 128, 8
        $region56: #{tpu_custom_call.1} parent=23 // pred_fallthru
          _
        // Predicated region
        $region57: #{tpu_custom_call.1} parent=23 // pred_check
          %p522 = pneg %p311
        $region58: #{tpu_custom_call.1} parent=23 // pred_check_branch
          %524 = sbr.rel (%p522) target = $region60
        $region59: #{tpu_custom_call.1} parent=23 // pred_region
          %p525 = scmp.lt.s32.totalorder %s37, 1
          %s526 = scalar_select %p525, %s37, 1
          %s527 = scalar_lea.vmem %s10, %s526
        $region60: #{tpu_custom_call.1} parent=23 // pred_fallthru
          _
        // Predicated region
        $region61: #{tpu_custom_call.1} parent=23 // pred_check
          %p528 = pneg %p337
        $region62: #{tpu_custom_call.1} parent=23 // pred_check_branch
          %530 = sbr.rel (%p528) target = $region64
        $region63: #{tpu_custom_call.1} parent=23 // pred_region
          %p531 = scmp.lt.s32.totalorder %s37, 1
          %s532 = scalar_select %p531, %s37, 1
          %s533 = scalar_lea.vmem %s11, %s532
        $region64: #{tpu_custom_call.1} parent=23 // pred_fallthru
          _
        // Predicated region
        $region65: #{tpu_custom_call.1} parent=23 // pred_check
          %p534 = pneg %p363
        $region66: #{tpu_custom_call.1} parent=23 // pred_check_branch
          %536 = sbr.rel (%p534) target = $region68
        $region67: #{tpu_custom_call.1} parent=23 // pred_region
          %p537 = scmp.lt.s32.totalorder %s37, 1
          %s538 = scalar_select %p537, %s37, 1
          %s539 = scalar_lea.vmem %s12, %s538
        $region68: #{tpu_custom_call.1} parent=23 // pred_fallthru
          _
      $region24: #{tpu_custom_call.1} parent=5 // pred_fallthru
        _
      %p540 = scmp.le.s32.totalorder 1, %s29
      %p541 = scmp.lt.s32.totalorder %s29, 5
      %p542 = pnand %p540, %p541
      %p543 = pneg %p542
      // Predicated region
      $region69: #{tpu_custom_call.1} parent=5 // pred_check
        _
      $region70: #{tpu_custom_call.1} parent=5 // pred_check_branch
        %545 = sbr.rel (%p542) target = $region72
      $region71: #{tpu_custom_call.1} parent=5 // pred_region
        %s546 = ssub.s32 %s29, 1
        // Predicated region
        $region73: #{tpu_custom_call.1} parent=71 // pred_check
          %p547 = pneg %p109
        $region74: #{tpu_custom_call.1} parent=71 // pred_check_branch
          %549 = sbr.rel (%p547) target = $region76
        $region75: #{tpu_custom_call.1} parent=71 // pred_region
          %550 = dma.done [#allocation4], 128
        $region76: #{tpu_custom_call.1} parent=71 // pred_fallthru
          _
        %s551 = sand.u32 %s34, 1
        %s552 = scalar_lea.sflag [#allocation7], %s551
        %s553 = sand.u32 %s148, 1
        %s554 = smul.addr %s553, 8
        %s555 = scalar_lea.vmem [#allocation6], %s554
        // Predicated region
        $region77: #{tpu_custom_call.1} parent=71 // pred_check
          %p556 = pneg %p161
        $region78: #{tpu_custom_call.1} parent=71 // pred_check_branch
          %558 = sbr.rel (%p556) target = $region80
        $region79: #{tpu_custom_call.1} parent=71 // pred_region
          %559 = dma.done %s552, 128
        $region80: #{tpu_custom_call.1} parent=71 // pred_fallthru
          _
        %s560 = sand.u32 %s34, 1
        %s561 = scalar_lea.sflag [#allocation7], %s560
        %s562 = sand.u32 %s226, 1
        %s563 = smul.addr %s562, 128
        %s564 = scalar_lea.vmem [#allocation8], %s563
        // Predicated region
        $region81: #{tpu_custom_call.1} parent=71 // pred_check
          %p565 = pneg %p239
        $region82: #{tpu_custom_call.1} parent=71 // pred_check_branch
          %567 = sbr.rel (%p565) target = $region84
        $region83: #{tpu_custom_call.1} parent=71 // pred_region
          %568 = dma.done %s561, 2048
        $region84: #{tpu_custom_call.1} parent=71 // pred_fallthru
          _
        %s569 = sand.u32 %s278, 1
        %s570 = scalar_lea.sflag [#allocation10], %s569
        %s571 = sand.u32 %s278, 1
        %s572 = smul.addr %s571, 128
        %s573 = scalar_lea.vmem [#allocation9], %s572
        // Predicated region
        $region85: #{tpu_custom_call.1} parent=71 // pred_check
          %p574 = pneg %p291
        $region86: #{tpu_custom_call.1} parent=71 // pred_check_branch
          %576 = sbr.rel (%p574) target = $region88
        $region87: #{tpu_custom_call.1} parent=71 // pred_region
          %577 = dma.done %s570, 2048
        $region88: #{tpu_custom_call.1} parent=71 // pred_fallthru
          _
        %p578 = scmp.lt.s32.totalorder %s38, 1
        %s579 = scalar_select %p578, %s38, 1
        %s580 = smul.addr %s579, 8
        %s581 = scalar_lea.vmem %s0, %s580
        %p582 = pneg %p67
        %p583 = pneg %p64
        %p584 = pneg %p88
        %p585 = pneg %p85
        %p586 = pneg %p109
        %p587 = pneg %p106
        %p588 = scmp.lt.s32.totalorder %s39, 1
        %s589 = scalar_select %p588, %s39, 1
        %s590 = smul.addr %s589, 8
        %s591 = scalar_lea.vmem %s3, %s590
        %p592 = pneg %p135
        %p593 = pneg %p132
        %s594 = sand.u32 %s34, 1
        %s595 = scalar_lea.sflag [#allocation7], %s594
        %s596 = sand.u32 %s148, 1
        %s597 = smul.addr %s596, 8
        %s598 = scalar_lea.vmem [#allocation6], %s597
        %p599 = pneg %p161
        %p600 = pneg %p158
        %p601 = scmp.lt.s32.totalorder %s39, 1
        %s602 = scalar_select %p601, %s39, 1
        %s603 = scalar_lea.vmem %s5, %s602
        %p604 = pneg %p187
        %p605 = pneg %p184
        %p606 = scmp.lt.s32.totalorder %s39, 1
        %s607 = scalar_select %p606, %s39, 1
        %s608 = scalar_lea.vmem %s6, %s607
        %p609 = pneg %p213
        %p610 = pneg %p210
        %s611 = sand.u32 %s34, 1
        %s612 = scalar_lea.sflag [#allocation7], %s611
        %s613 = sand.u32 %s226, 1
        %s614 = smul.addr %s613, 128
        %s615 = scalar_lea.vmem [#allocation8], %s614
        %p616 = pneg %p239
        %p617 = pneg %p236
        %p618 = scmp.lt.s32.totalorder %s39, 1
        %s619 = scalar_select %p618, %s39, 1
        %s620 = scalar_lea.vmem %s8, %s619
        %p621 = pneg %p265
        %p622 = pneg %p262
        %s623 = sand.u32 %s278, 1
        %s624 = scalar_lea.sflag [#allocation10], %s623
        %s625 = sand.u32 %s278, 1
        %s626 = smul.addr %s625, 128
        %s627 = scalar_lea.vmem [#allocation9], %s626
        %p628 = pneg %p291
        %p629 = pneg %p288
        %p630 = scmp.lt.s32.totalorder %s39, 1
        %s631 = scalar_select %p630, %s39, 1
        %s632 = scalar_lea.vmem %s10, %s631
        %p633 = pneg %p317
        %p634 = pneg %p314
        %p635 = scmp.lt.s32.totalorder %s39, 1
        %s636 = scalar_select %p635, %s39, 1
        %s637 = scalar_lea.vmem %s11, %s636
        %p638 = pneg %p343
        %p639 = pneg %p340
        %p640 = scmp.lt.s32.totalorder %s39, 1
        %s641 = scalar_select %p640, %s39, 1
        %s642 = scalar_lea.vmem %s12, %s641
        %p643 = pneg %p369
        %p644 = pneg %p366
        %p645 = pneg %p397
        %p646 = pneg %p394
        %s647 = sand.u32 %s384, 1
        %s648 = scalar_lea.sflag [#allocation5], %s647
        %s649 = sand.u32 %s384, 1
        %s650 = smul.addr %s649, 8
        %s651 = scalar_lea.vmem [#allocation11], %s650
        %p652 = scmp.lt.s32.totalorder %s38, 1
        %s653 = scalar_select %p652, %s38, 1
        %s654 = smul.addr %s653, 8
        %s655 = scalar_lea.vmem %s0, %s654
        %p656 = scmp.lt.s32.totalorder %s39, 1
        %s657 = scalar_select %p656, %s39, 1
        %s658 = smul.addr %s657, 8
        %s659 = scalar_lea.vmem %s3, %s658
        %p660 = scmp.lt.s32.totalorder %s39, 1
        %s661 = scalar_select %p660, %s39, 1
        %s662 = scalar_lea.vmem %s5, %s661
        %p663 = scmp.lt.s32.totalorder %s39, 1
        %s664 = scalar_select %p663, %s39, 1
        %s665 = scalar_lea.vmem %s6, %s664
        %p666 = scmp.lt.s32.totalorder %s39, 1
        %s667 = scalar_select %p666, %s39, 1
        %s668 = scalar_lea.vmem %s8, %s667
        %p669 = scmp.lt.s32.totalorder %s39, 1
        %s670 = scalar_select %p669, %s39, 1
        %s671 = scalar_lea.vmem %s10, %s670
        %p672 = scmp.lt.s32.totalorder %s39, 1
        %s673 = scalar_select %p672, %s39, 1
        %s674 = scalar_lea.vmem %s11, %s673
        %p675 = scmp.lt.s32.totalorder %s39, 1
        %s676 = scalar_select %p675, %s39, 1
        %s677 = scalar_lea.vmem %s12, %s676
        %p678 = scmp.eq.s32.totalorder %s39, 0
        // Predicated region
        $region89: #{tpu_custom_call.1} parent=71 // pred_check
          %p679 = pneg %p678
        $region90: #{tpu_custom_call.1} parent=71 // pred_check_branch
          %681 = sbr.rel (%p679) target = $region92
        $region91: #{tpu_custom_call.1} parent=71 // pred_region
          %v682 = vld [vmem:[%s655] sm:$0xff]
          %683 = vst [vmem:[#allocation2] sm:$0xff] %v682
        $region92: #{tpu_custom_call.1} parent=71 // pred_fallthru
          _
        %v684 = vld [vmem:[%s1] sm:$0xff]
        %v685 = vld [vmem:[%s1 + $0x8] sm:$0xff]
        %v686 = vld [vmem:[#allocation3] sm:$0xff]
        %v687 = vld [vmem:[%s659] sm:$0xff]
        %v688 = vld [vmem:[%s555] sm:$0xff]
        %v689 = vld [vmem:[%s662] sm:$0x1]
        %v690 = vld [vmem:[%s665] sm:$0x1]
        %v691 = vld [vmem:[%s564] sm:$0xff]
        %v692 = vld [vmem:[%s564 + $0x8] sm:$0xff]
        %v693 = vld [vmem:[%s564 + $0x10] sm:$0xff]
        %v694 = vld [vmem:[%s564 + $0x18] sm:$0xff]
        %v695 = vld [vmem:[%s564 + $0x20] sm:$0xff]
        %v696 = vld [vmem:[%s564 + $0x28] sm:$0xff]
        %v697 = vld [vmem:[%s564 + $0x30] sm:$0xff]
        %v698 = vld [vmem:[%s564 + $0x38] sm:$0xff]
        %v699 = vld [vmem:[%s564 + $0x40] sm:$0xff]
        %v700 = vld [vmem:[%s564 + $0x48] sm:$0xff]
        %v701 = vld [vmem:[%s564 + $0x50] sm:$0xff]
        %v702 = vld [vmem:[%s564 + $0x58] sm:$0xff]
        %v703 = vld [vmem:[%s564 + $0x60] sm:$0xff]
        %v704 = vld [vmem:[%s564 + $0x68] sm:$0xff]
        %v705 = vld [vmem:[%s564 + $0x70] sm:$0xff]
        %v706 = vld [vmem:[%s564 + $0x78] sm:$0xff]
        %v707 = vld [vmem:[%s668] sm:$0x1]
        %v708 = vld [vmem:[%s573] sm:$0xff]
        %v709 = vld [vmem:[%s573 + $0x8] sm:$0xff]
        %v710 = vld [vmem:[%s573 + $0x10] sm:$0xff]
        %v711 = vld [vmem:[%s573 + $0x18] sm:$0xff]
        %v712 = vld [vmem:[%s573 + $0x20] sm:$0xff]
        %v713 = vld [vmem:[%s573 + $0x28] sm:$0xff]
        %v714 = vld [vmem:[%s573 + $0x30] sm:$0xff]
        %v715 = vld [vmem:[%s573 + $0x38] sm:$0xff]
        %v716 = vld [vmem:[%s573 + $0x40] sm:$0xff]
        %v717 = vld [vmem:[%s573 + $0x48] sm:$0xff]
        %v718 = vld [vmem:[%s573 + $0x50] sm:$0xff]
        %v719 = vld [vmem:[%s573 + $0x58] sm:$0xff]
        %v720 = vld [vmem:[%s573 + $0x60] sm:$0xff]
        %v721 = vld [vmem:[%s573 + $0x68] sm:$0xff]
        %v722 = vld [vmem:[%s573 + $0x70] sm:$0xff]
        %v723 = vld [vmem:[%s573 + $0x78] sm:$0xff]
        %v724 = vld [vmem:[%s671] sm:$0x1]
        %v725 = vld [vmem:[%s674] sm:$0x1]
        %v726 = vld [vmem:[%s677] sm:$0x1]
        %v727 = vld [vmem:[#allocation2] sm:$0xff]
        %vm728 = vcmask 64512
        %v730 = vsel %vm728, %v684, 0
        %v733 = vsel %vm728, %v685, 0
        %735 = vmatprep.subr.mxu0 0.0
        %736 = vmatpush1.msra.mxu0 %v727
        %737 = vmatprep.subr.mxu0 0.0
        %738 = vmatpush1.msra.mxu0 0.0
        %739 = vmatprep.subr.mxu0 0.0
        %740 = vmatpush1.msra.mxu0 0.0
        %741 = vmatprep.subr.mxu0 0.0
        %742 = vmatpush1.msra.mxu0 0.0
        %743 = vmatprep.subr.mxu0 0.0
        %744 = vmatpush1.msra.mxu0 0.0
        %745 = vmatprep.subr.mxu0 0.0
        %746 = vmatpush1.msra.mxu0 0.0
        %747 = vmatprep.subr.mxu0 0.0
        %748 = vmatpush1.msra.mxu0 0.0
        %749 = vmatprep.subr.mxu0 0.0
        %750 = vmatpush1.msra.mxu0 0.0
        %751 = vmatprep.subr.mxu0 0.0
        %752 = vmatpush1.msra.mxu0 0.0
        %753 = vmatprep.subr.mxu0 0.0
        %754 = vmatpush1.msra.mxu0 0.0
        %755 = vmatprep.subr.mxu0 0.0
        %756 = vmatpush1.msra.mxu0 0.0
        %757 = vmatprep.subr.mxu0 0.0
        %758 = vmatpush1.msra.mxu0 0.0
        %759 = vmatprep.subr.mxu0 0.0
        %760 = vmatpush1.msra.mxu0 0.0
        %761 = vmatprep.subr.mxu0 0.0
        %762 = vmatpush1.msra.mxu0 0.0
        %763 = vmatprep.subr.mxu0 0.0
        %764 = vmatpush1.msra.mxu0 0.0
        %765 = vmatprep.subr.mxu0 0.0
        %766 = vmatpush1.msra.mxu0 0.0
        %767 = vmatprep.subr.mxu0 0.0
        %768 = vmatpush1.msra.mxu0 0.0
        %769 = vmatprep.subr.mxu0 0.0
        %770 = vmatpush1.msra.mxu0 0.0
        %771 = vmatprep.subr.mxu0 0.0
        %772 = vmatpush1.msra.mxu0 0.0
        %773 = vmatprep.subr.mxu0 0.0
        %774 = vmatpush1.msra.mxu0 0.0
        %775 = vmatprep.subr.mxu0 0.0
        %776 = vmatpush1.msra.mxu0 0.0
        %777 = vmatprep.subr.mxu0 0.0
        %778 = vmatpush1.msra.mxu0 0.0
        %779 = vmatprep.subr.mxu0 0.0
        %780 = vmatpush1.msra.mxu0 0.0
        %781 = vmatprep.subr.mxu0 0.0
        %782 = vmatpush1.msra.mxu0 0.0
        %783 = vmatprep.subr.mxu0 0.0
        %784 = vmatpush1.msra.mxu0 0.0
        %785 = vmatprep.subr.mxu0 0.0
        %786 = vmatpush1.msra.mxu0 0.0
        %787 = vmatprep.subr.mxu0 0.0
        %788 = vmatpush1.msra.mxu0 0.0
        %789 = vmatprep.subr.mxu0 0.0
        %790 = vmatpush1.msra.mxu0 0.0
        %791 = vmatprep.subr.mxu0 0.0
        %792 = vmatpush1.msra.mxu0 0.0
        %793 = vmatprep.subr.mxu0 0.0
        %794 = vmatpush1.msra.mxu0 0.0
        %795 = vmatprep.subr.mxu0 0.0
        %796 = vmatpush1.msra.mxu0 0.0
        %797 = vmatprep.subr.mxu0 0.0
        %798 = vmatpush1.msra.mxu0 0.0
        %799 = vmatprep.mubr.f32.mxu0 0.0
        %800 = vmatmul.mubr.f32.gmra.mrb[0].mxu0 %v730
        %v801 = vpop.f32.mrb[0].mxu0
        %v802 = vadd.f32 0.0, %v801
        %v803 = vpop.f32.mrb[0].mxu0
        %804 = vmatprep.mubr.f32.mxu0 0.0
        %805 = vmatmul.mubr.f32.gmra.mrb[0].mxu0 %v733
        %v806 = vpop.f32.mrb[0].mxu0
        %v807 = vadd.f32 0.0, %v806
        %v808 = vpop.f32.mrb[0].mxu0
        %809 = vdwg.mxu0
        %v810 = vmul.f32 %v802, %v687
        %v811 = vmul.f32 %v807, %v688
        %v812 = vsub.f32 %v810, %v811
        %v813 = vmul.f32 %v802, %v688
        %v814 = vmul.f32 %v807, %v687
        %v815 = vadd.f32 %v813, %v814
        %vm816 = vcmask 130048
        %v818 = vsel %vm816, %v686, 0
        %820 = vmatprep.subr.mxu0 0.0
        %821 = vmatpush1.msra.mxu0 %v812
        %822 = vmatprep.subr.mxu0 0.0
        %823 = vmatpush1.msra.mxu0 %v815
        %824 = vmatprep.subr.mxu0 0.0
        %825 = vmatpush1.msra.mxu0 0.0
        %826 = vmatprep.subr.mxu0 0.0
        %827 = vmatpush1.msra.mxu0 0.0
        %828 = vmatprep.subr.mxu0 0.0
        %829 = vmatpush1.msra.mxu0 0.0
        %830 = vmatprep.subr.mxu0 0.0
        %831 = vmatpush1.msra.mxu0 0.0
        %832 = vmatprep.subr.mxu0 0.0
        %833 = vmatpush1.msra.mxu0 0.0
        %834 = vmatprep.subr.mxu0 0.0
        %835 = vmatpush1.msra.mxu0 0.0
        %836 = vmatprep.subr.mxu0 0.0
        %837 = vmatpush1.msra.mxu0 0.0
        %838 = vmatprep.subr.mxu0 0.0
        %839 = vmatpush1.msra.mxu0 0.0
        %840 = vmatprep.subr.mxu0 0.0
        %841 = vmatpush1.msra.mxu0 0.0
        %842 = vmatprep.subr.mxu0 0.0
        %843 = vmatpush1.msra.mxu0 0.0
        %844 = vmatprep.subr.mxu0 0.0
        %845 = vmatpush1.msra.mxu0 0.0
        %846 = vmatprep.subr.mxu0 0.0
        %847 = vmatpush1.msra.mxu0 0.0
        %848 = vmatprep.subr.mxu0 0.0
        %849 = vmatpush1.msra.mxu0 0.0
        %850 = vmatprep.subr.mxu0 0.0
        %851 = vmatpush1.msra.mxu0 0.0
        %852 = vmatprep.subr.mxu0 0.0
        %853 = vmatpush1.msra.mxu0 0.0
        %854 = vmatprep.subr.mxu0 0.0
        %855 = vmatpush1.msra.mxu0 0.0
        %856 = vmatprep.subr.mxu0 0.0
        %857 = vmatpush1.msra.mxu0 0.0
        %858 = vmatprep.subr.mxu0 0.0
        %859 = vmatpush1.msra.mxu0 0.0
        %860 = vmatprep.subr.mxu0 0.0
        %861 = vmatpush1.msra.mxu0 0.0
        %862 = vmatprep.subr.mxu0 0.0
        %863 = vmatpush1.msra.mxu0 0.0
        %864 = vmatprep.subr.mxu0 0.0
        %865 = vmatpush1.msra.mxu0 0.0
        %866 = vmatprep.subr.mxu0 0.0
        %867 = vmatpush1.msra.mxu0 0.0
        %868 = vmatprep.subr.mxu0 0.0
        %869 = vmatpush1.msra.mxu0 0.0
        %870 = vmatprep.subr.mxu0 0.0
        %871 = vmatpush1.msra.mxu0 0.0
        %872 = vmatprep.subr.mxu0 0.0
        %873 = vmatpush1.msra.mxu0 0.0
        %874 = vmatprep.subr.mxu0 0.0
        %875 = vmatpush1.msra.mxu0 0.0
        %876 = vmatprep.subr.mxu0 0.0
        %877 = vmatpush1.msra.mxu0 0.0
        %878 = vmatprep.subr.mxu0 0.0
        %879 = vmatpush1.msra.mxu0 0.0
        %880 = vmatprep.subr.mxu0 0.0
        %881 = vmatpush1.msra.mxu0 0.0
        %882 = vmatprep.subr.mxu0 0.0
        %883 = vmatpush1.msra.mxu0 0.0
        %884 = vmatprep.mubr.f32.mxu0 0.0
        %885 = vmatmul.mubr.f32.gmra.mrb[0].mxu0 %v818
        %v886 = vpop.f32.mrb[0].mxu0
        %v887 = vadd.f32 %v727, %v886
        %v888 = vpop.f32.mrb[0].mxu0
        %889 = vdwg.mxu0
        %890 = vadd.xlane.f32.xlu0 %v887
        %v891 = vpop.xlane.xlu0 %890
        %v892 = vmul.f32 %v891, 0.03125
        %v893 = vsub.f32 %v887, %v892
        %v894 = vlaneseq
        %v895 = vand.u32 %v894, 127
        %vm896 = vcmp.lt.s32.totalorder %v895, 32
        %v897 = vsel %vm896, 1, 0
        %vm898 = vcmp.eq.s32.totalorder %v897, 1
        %v899 = vsel %vm898, %v893, 0.0
        %v900 = vmul.f32 %v899, %v899
        %901 = vadd.xlane.f32.xlu0 %v900
        %v902 = vpop.xlane.xlu0 %901
        %v903 = vmul.f32 %v902, 0.03125
        %v904 = vadd.f32 %v903, 1e-12
        %v905 = vrsqrt.pop %v904
        %v906 = vmul.f32 %v893, %v905
        %v908 = vlaneseq
        %v909 = vshrl.u32 %v908, 7
        %v910 = vsub.s32 0, %v909
        %v911 = vrot.slane %v689, %v910
        %v913 = vmul.f32 %v911, %v906
        %v915 = vlaneseq
        %v916 = vshrl.u32 %v915, 7
        %v917 = vsub.s32 0, %v916
        %v918 = vrot.slane %v690, %v917
        %v920 = vadd.f32 %v913, %v918
        %v922 = vlaneseq
        %v923 = vshrl.u32 %v922, 7
        %v924 = vsub.s32 0, %v923
        %v925 = vrot.slane %v707, %v924
        %927 = vmatprep.subr.mxu0 0.0
        %928 = vmatpush1.msra.mxu0 %v691
        %929 = vmatprep.subr.mxu0 0.0
        %930 = vmatpush1.msra.mxu0 %v692
        %931 = vmatprep.subr.mxu0 0.0
        %932 = vmatpush1.msra.mxu0 %v693
        %933 = vmatprep.subr.mxu0 0.0
        %934 = vmatpush1.msra.mxu0 %v694
        %935 = vmatprep.subr.mxu0 0.0
        %936 = vmatpush1.msra.mxu0 %v695
        %937 = vmatprep.subr.mxu0 0.0
        %938 = vmatpush1.msra.mxu0 %v696
        %939 = vmatprep.subr.mxu0 0.0
        %940 = vmatpush1.msra.mxu0 %v697
        %941 = vmatprep.subr.mxu0 0.0
        %942 = vmatpush1.msra.mxu0 %v698
        %943 = vmatprep.subr.mxu0 0.0
        %944 = vmatpush1.msra.mxu0 %v699
        %945 = vmatprep.subr.mxu0 0.0
        %946 = vmatpush1.msra.mxu0 %v700
        %947 = vmatprep.subr.mxu0 0.0
        %948 = vmatpush1.msra.mxu0 %v701
        %949 = vmatprep.subr.mxu0 0.0
        %950 = vmatpush1.msra.mxu0 %v702
        %951 = vmatprep.subr.mxu0 0.0
        %952 = vmatpush1.msra.mxu0 %v703
        %953 = vmatprep.subr.mxu0 0.0
        %954 = vmatpush1.msra.mxu0 %v704
        %955 = vmatprep.subr.mxu0 0.0
        %956 = vmatpush1.msra.mxu0 %v705
        %957 = vmatprep.subr.mxu0 0.0
        %958 = vmatpush1.msra.mxu0 %v706
        %959 = vmatprep.subr.mxu0 0.0
        %960 = vmatpush1.msra.mxu0 0.0
        %961 = vmatprep.subr.mxu0 0.0
        %962 = vmatpush1.msra.mxu0 0.0
        %963 = vmatprep.subr.mxu0 0.0
        %964 = vmatpush1.msra.mxu0 0.0
        %965 = vmatprep.subr.mxu0 0.0
        %966 = vmatpush1.msra.mxu0 0.0
        %967 = vmatprep.subr.mxu0 0.0
        %968 = vmatpush1.msra.mxu0 0.0
        %969 = vmatprep.subr.mxu0 0.0
        %970 = vmatpush1.msra.mxu0 0.0
        %971 = vmatprep.subr.mxu0 0.0
        %972 = vmatpush1.msra.mxu0 0.0
        %973 = vmatprep.subr.mxu0 0.0
        %974 = vmatpush1.msra.mxu0 0.0
        %975 = vmatprep.subr.mxu0 0.0
        %976 = vmatpush1.msra.mxu0 0.0
        %977 = vmatprep.subr.mxu0 0.0
        %978 = vmatpush1.msra.mxu0 0.0
        %979 = vmatprep.subr.mxu0 0.0
        %980 = vmatpush1.msra.mxu0 0.0
        %981 = vmatprep.subr.mxu0 0.0
        %982 = vmatpush1.msra.mxu0 0.0
        %983 = vmatprep.subr.mxu0 0.0
        %984 = vmatpush1.msra.mxu0 0.0
        %985 = vmatprep.subr.mxu0 0.0
        %986 = vmatpush1.msra.mxu0 0.0
        %987 = vmatprep.subr.mxu0 0.0
        %988 = vmatpush1.msra.mxu0 0.0
        %989 = vmatprep.subr.mxu0 0.0
        %990 = vmatpush1.msra.mxu0 0.0
        %991 = vmatprep.mubr.f32.mxu0 0.0
        %992 = vmatmul.mubr.f32.gmra.mrb[0].mxu0 %v920
        %v993 = vpop.f32.mrb[0].mxu0
        %v994 = vadd.f32 %v925, %v993
        %v995 = vpop.f32.mrb[0].mxu0
        %996 = vdwg.mxu0
        %v997 = vmul.f32 %v994, 0.5
        %v998 = vmul.f32 %v994, 0.70710677
        %v999 = verf.f32.pop %v998
        %v1000 = vadd.f32 %v999, 1.0
        %v1001 = vmul.f32 %v997, %v1000
        %v1003 = vlaneseq
        %v1004 = vshrl.u32 %v1003, 7
        %v1005 = vsub.s32 0, %v1004
        %v1006 = vrot.slane %v724, %v1005
        %1008 = vmatprep.subr.mxu0 0.0
        %1009 = vmatpush1.msra.mxu0 %v708
        %1010 = vmatprep.subr.mxu0 0.0
        %1011 = vmatpush1.msra.mxu0 %v709
        %1012 = vmatprep.subr.mxu0 0.0
        %1013 = vmatpush1.msra.mxu0 %v710
        %1014 = vmatprep.subr.mxu0 0.0
        %1015 = vmatpush1.msra.mxu0 %v711
        %1016 = vmatprep.subr.mxu0 0.0
        %1017 = vmatpush1.msra.mxu0 %v712
        %1018 = vmatprep.subr.mxu0 0.0
        %1019 = vmatpush1.msra.mxu0 %v713
        %1020 = vmatprep.subr.mxu0 0.0
        %1021 = vmatpush1.msra.mxu0 %v714
        %1022 = vmatprep.subr.mxu0 0.0
        %1023 = vmatpush1.msra.mxu0 %v715
        %1024 = vmatprep.subr.mxu0 0.0
        %1025 = vmatpush1.msra.mxu0 %v716
        %1026 = vmatprep.subr.mxu0 0.0
        %1027 = vmatpush1.msra.mxu0 %v717
        %1028 = vmatprep.subr.mxu0 0.0
        %1029 = vmatpush1.msra.mxu0 %v718
        %1030 = vmatprep.subr.mxu0 0.0
        %1031 = vmatpush1.msra.mxu0 %v719
        %1032 = vmatprep.subr.mxu0 0.0
        %1033 = vmatpush1.msra.mxu0 %v720
        %1034 = vmatprep.subr.mxu0 0.0
        %1035 = vmatpush1.msra.mxu0 %v721
        %1036 = vmatprep.subr.mxu0 0.0
        %1037 = vmatpush1.msra.mxu0 %v722
        %1038 = vmatprep.subr.mxu0 0.0
        %1039 = vmatpush1.msra.mxu0 %v723
        %1040 = vmatprep.subr.mxu0 0.0
        %1041 = vmatpush1.msra.mxu0 0.0
        %1042 = vmatprep.subr.mxu0 0.0
        %1043 = vmatpush1.msra.mxu0 0.0
        %1044 = vmatprep.subr.mxu0 0.0
        %1045 = vmatpush1.msra.mxu0 0.0
        %1046 = vmatprep.subr.mxu0 0.0
        %1047 = vmatpush1.msra.mxu0 0.0
        %1048 = vmatprep.subr.mxu0 0.0
        %1049 = vmatpush1.msra.mxu0 0.0
        %1050 = vmatprep.subr.mxu0 0.0
        %1051 = vmatpush1.msra.mxu0 0.0
        %1052 = vmatprep.subr.mxu0 0.0
        %1053 = vmatpush1.msra.mxu0 0.0
        %1054 = vmatprep.subr.mxu0 0.0
        %1055 = vmatpush1.msra.mxu0 0.0
        %1056 = vmatprep.subr.mxu0 0.0
        %1057 = vmatpush1.msra.mxu0 0.0
        %1058 = vmatprep.subr.mxu0 0.0
        %1059 = vmatpush1.msra.mxu0 0.0
        %1060 = vmatprep.subr.mxu0 0.0
        %1061 = vmatpush1.msra.mxu0 0.0
        %1062 = vmatprep.subr.mxu0 0.0
        %1063 = vmatpush1.msra.mxu0 0.0
        %1064 = vmatprep.subr.mxu0 0.0
        %1065 = vmatpush1.msra.mxu0 0.0
        %1066 = vmatprep.subr.mxu0 0.0
        %1067 = vmatpush1.msra.mxu0 0.0
        %1068 = vmatprep.subr.mxu0 0.0
        %1069 = vmatpush1.msra.mxu0 0.0
        %1070 = vmatprep.subr.mxu0 0.0
        %1071 = vmatpush1.msra.mxu0 0.0
        %1072 = vmatprep.mubr.f32.mxu0 0.0
        %1073 = vmatmul.mubr.f32.gmra.mrb[0].mxu0 %v1001
        %v1074 = vpop.f32.mrb[0].mxu0
        %v1075 = vadd.f32 %v1006, %v1074
        %v1076 = vpop.f32.mrb[0].mxu0
        %1077 = vdwg.mxu0
        %v1078 = vadd.f32 %v1075, %v920
        %1079 = vadd.xlane.f32.xlu0 %v1078
        %v1080 = vpop.xlane.xlu0 %1079
        %v1081 = vmul.f32 %v1080, 0.03125
        %v1082 = vsub.f32 %v1078, %v1081
        %v1083 = vsel %vm898, %v1082, 0.0
        %v1084 = vmul.f32 %v1083, %v1083
        %1085 = vadd.xlane.f32.xlu0 %v1084
        %v1086 = vpop.xlane.xlu0 %1085
        %v1087 = vmul.f32 %v1086, 0.03125
        %v1088 = vadd.f32 %v1087, 1e-12
        %v1089 = vrsqrt.pop %v1088
        %v1090 = vmul.f32 %v1082, %v1089
        %v1092 = vlaneseq
        %v1093 = vshrl.u32 %v1092, 7
        %v1094 = vsub.s32 0, %v1093
        %v1095 = vrot.slane %v725, %v1094
        %v1097 = vmul.f32 %v1095, %v1090
        %v1099 = vlaneseq
        %v1100 = vshrl.u32 %v1099, 7
        %v1101 = vsub.s32 0, %v1100
        %v1102 = vrot.slane %v726, %v1101
        %v1104 = vadd.f32 %v1097, %v1102
        %1105 = vst [vmem:[#allocation2] sm:$0xff] %v1104
        %1106 = vst [vmem:[%s651] sm:$0xff] %v1104
        %s1107 = sand.u32 %s384, 1
        %s1108 = scalar_lea.sflag [#allocation5], %s1107
        %s1109 = sand.u32 %s384, 1
        %s1110 = smul.addr %s1109, 8
        %s1111 = scalar_lea.vmem [#allocation11], %s1110
        // Predicated region
        $region93: #{tpu_custom_call.1} parent=71 // pred_check
          %p1112 = pneg %p394
        $region94: #{tpu_custom_call.1} parent=71 // pred_check_branch
          %1114 = sbr.rel (%p1112) target = $region96
        $region95: #{tpu_custom_call.1} parent=71 // pred_region
          %s1116 = ssub.s32 128, 128
          %1117 = vsyncadd %s1108, %s1116
          %s1118 = smul.addr %s39, 2
          %s1119 = sadd.s32 %s38, %s1118
          %s1120 = smul.addr %s1119, 128
          %s1121 = scalar_lea.hbm %s13, %s1120
          %s1123 = sshll.u32 %s1111, 4
          %s1124 = int_to_ptr.vmem [resolvable:$true] %s1123
          %1126 = dma.vmem_to_hbm [thread:$0]  %s1124, 128, %s1121, %s1108
        $region96: #{tpu_custom_call.1} parent=71 // pred_fallthru
          _
      $region72: #{tpu_custom_call.1} parent=5 // pred_fallthru
        _
      %p1127 = scmp.le.s32.totalorder 2, %s29
      // Predicated region
      $region97: #{tpu_custom_call.1} parent=5 // pred_check
        %p1128 = pneg %p1127
      $region98: #{tpu_custom_call.1} parent=5 // pred_check_branch
        %1130 = sbr.rel (%p1128) target = $region100
      $region99: #{tpu_custom_call.1} parent=5 // pred_region
        %s1131 = ssub.s32 %s29, 2
        // Predicated region
        $region101: #{tpu_custom_call.1} parent=99 // pred_check
          %p1132 = pneg %p400
        $region102: #{tpu_custom_call.1} parent=99 // pred_check_branch
          %1134 = sbr.rel (%p1132) target = $region104
        $region103: #{tpu_custom_call.1} parent=99 // pred_region
          %s1135 = sand.u32 %s385, 1
          %s1136 = scalar_lea.sflag [#allocation5], %s1135
          %s1137 = sand.u32 %s385, 1
          %s1138 = smul.addr %s1137, 8
          %s1139 = scalar_lea.vmem [#allocation11], %s1138
          %1140 = dma.done %s1136, 128
        $region104: #{tpu_custom_call.1} parent=99 // pred_fallthru
          _
      $region100: #{tpu_custom_call.1} parent=5 // pred_fallthru
        _
    $region6: #{tpu_custom_call.1} parent=1 // loop_footer
      %s33 = sadd.s32 1, %s29
    $region7: #{tpu_custom_call.1} parent=1 // loop_footer_branch
      %28 = sbr.rel target = $region3
    $region8: #{tpu_custom_call.1} parent=1 // loop_exit
      _
    %1141 = vsyncpa [#allocation4], 1
    %s1142 = scalar_lea.sflag [#allocation4], 1
    %1143 = vsyncpa %s1142, 1
    %1144 = vsyncpa [#allocation7], 1
    %s1145 = scalar_lea.sflag [#allocation7], 1
    %1146 = vsyncpa %s1145, 1
    %1147 = vsyncpa [#allocation10], 1
    %s1148 = scalar_lea.sflag [#allocation10], 1
    %1149 = vsyncpa %s1148, 1
    %1150 = vsyncpa [#allocation5], 1
    %s1151 = scalar_lea.sflag [#allocation5], 1
    %1152 = vsyncpa %s1151, 1

</llo_original>
